<compile_context>
chip_gen: v5e
topology: v5e:2x2
jax: 0.10.0
libtpu: 0.0.40
codegen_flags: <defaults>
</compile_context>

<pallas_src>
import functools
import numpy as np
import jax
import jax.numpy as jnp
from jax import lax
from jax.experimental import pallas as pl
from jax.experimental.pallas import tpu as pltpu


def _round_up(n, m):
    return ((n + m - 1) // m) * m


def _vmem_capacity_bytes():
    # Generation-aware VMEM (128 MiB on v5e/v6e, 64 MiB per TC on v7x); conservative fallback.
    try:
        return int(pltpu.get_tpu_info().vmem_capacity_bytes)
    except Exception:
        return 64 << 20


def _pick_time_chunk(T, bb, h_pad, capacity):
    # Streamed bytes / timestep / batch row: bf16 gx (4*h_pad*2) + bf16 y (h_pad*2) + f32 mask (4),
    # double-buffered by the BlockSpec pipeline.
    per_step = bb * (10 * h_pad + 4) * 2
    budget = max(capacity * 2 // 5, 4 << 20)      # ~40% of physical VMEM for the streamed blocks
    cap = max(1, min(1024, budget // per_step))
    n_c = -(-T // cap)                            # cdiv: number of time chunks
    tc = -(-T // n_c)                             # balanced chunk length -> minimal tail padding
    if tc > 8:
        tc = _round_up(tc, 8)                     # keep the unroll factor (8) a divisor of tc
    return tc, n_c


@functools.lru_cache(maxsize=None)
def _build_autoreset_lstm(T, b_pad, h_pad, bb, tc, n_c, vmem_limit):
    t_pad = tc * n_c
    needs_tail = t_pad != T
    # Partial unroll: full unroll for short chunks, factor 8 otherwise (divides tc by construction).
    unroll = tc if tc <= 16 else 8

    def kernel(gx_ref, m_ref, h0_ref, whh_ref, y_ref, hout_ref, state_sc):
        chunk = pl.program_id(1)

        # (Re-)initialize the carried state from h0 at the first time chunk of each batch block.
        @pl.when(chunk == 0)
        def _():
            state_sc[...] = h0_ref[...]

        whh = whh_ref[...]                        # (h_pad, 4*h_pad) bf16, loop-invariant load

        def step(t, carry):
            h, c = carry                          # f32 carries
            mask = m_ref[t]                       # (bb, 1), broadcasts over hidden
            h = h * mask
            c = c * mask
            # Only the recurrent matmul sits on the serial path; bf16 operands on the MXU,
            # f32 accumulation.  x-projection + bias precomputed and streamed as bf16 gx.
            gates = jnp.dot(h.astype(jnp.bfloat16), whh,
                            preferred_element_type=jnp.float32)
            gates = gates + gx_ref[t].astype(jnp.float32)
            i = jax.nn.sigmoid(gates[:, 0 * h_pad:1 * h_pad])   # tile-aligned slices (h_pad%128==0)
            f = jax.nn.sigmoid(gates[:, 1 * h_pad:2 * h_pad])
            g = jnp.tanh(gates[:, 2 * h_pad:3 * h_pad])
            o = jax.nn.sigmoid(gates[:, 3 * h_pad:4 * h_pad])
            c_new = f * c + i * g
            h_new = o * jnp.tanh(c_new)
            y_ref[t] = h_new.astype(y_ref.dtype)  # lane-dense, unmasked bf16 store
            if needs_tail:                        # static flag; only compiled when T was padded
                valid = (chunk * tc + t) < T
                h_new = jnp.where(valid, h_new, h)
                c_new = jnp.where(valid, c_new, c)
            return (h_new, c_new)

        h0 = state_sc[:, :h_pad]
        c0 = state_sc[:, h_pad:]
        h_f, c_f = lax.fori_loop(0, tc, step, (h0, c0), unroll=unroll)

        state_sc[:, :h_pad] = h_f
        state_sc[:, h_pad:] = c_f

        @pl.when(chunk == pl.num_programs(1) - 1)
        def _():
            hout_ref[...] = state_sc[...]         # single contiguous (bb, 2*h_pad) store

    return pl.pallas_call(
        kernel,
        out_shape=(jax.ShapeDtypeStruct((t_pad, b_pad, h_pad), jnp.bfloat16),
                   jax.ShapeDtypeStruct((b_pad, 2 * h_pad), jnp.float32)),
        grid_spec=pltpu.PrefetchScalarGridSpec(
            num_scalar_prefetch=0,
            grid=(b_pad // bb, n_c),
            in_specs=[
                pl.BlockSpec((tc, bb, 4 * h_pad), lambda b, c: (c, b, 0)),  # x-gates (bf16)
                pl.BlockSpec((tc, bb, 1), lambda b, c: (c, b, 0)),          # masks (1 - on_reset)
                pl.BlockSpec((bb, 2 * h_pad), lambda b, c: (b, 0)),         # initial (h|c)
                pl.BlockSpec((h_pad, 4 * h_pad), lambda b, c: (0, 0)),      # W_hh^T (bf16, resident)
            ],
            out_specs=[
                pl.BlockSpec((tc, bb, h_pad), lambda b, c: (c, b, 0)),      # y (bf16)
                pl.BlockSpec((bb, 2 * h_pad), lambda b, c: (b, 0)),         # final (h|c)
            ],
            scratch_shapes=[pltpu.VMEM((bb, 2 * h_pad), jnp.float32)],      # carried (h|c)
        ),
        compiler_params=pltpu.CompilerParams(
            dimension_semantics=("parallel", "arbitrary"),   # batch blocks independent, time serial
            vmem_limit_bytes=vmem_limit),
    )


def autoreset_rnn_forward(x, h, on_reset, params):
    """JAX equivalent of AutoResetRNN.forward(x, h, on_reset) for rnn_type='lstm', num_layers=1.

    NOTE: on_reset must be binary {0,1}; that is what makes per-step masking equivalent to the
    PyTorch segmented-reset loop.
    """
    T, B, D = x.shape
    H = params["whh"].shape[1]
    if on_reset is None:
        on_reset = jnp.zeros((T, B, 1), jnp.float32)

    b_pad = _round_up(B, 8)
    h_pad = _round_up(H, 128)
    # Single batch block: keep the MXU M dimension as full as possible per serial step.
    bb = b_pad
    capacity = _vmem_capacity_bytes()
    tc, n_c = _pick_time_chunk(T, bb, h_pad, capacity)
    t_pad = tc * n_c

    f32, bf16 = jnp.float32, jnp.bfloat16

    # Pad each gate block so it occupies a lane-aligned h_pad-wide column block (zeros elsewhere).
    def pad_gate_rows(w):                                   # (4H, K) -> (4*h_pad, K)
        K = w.shape[-1]
        return (jnp.zeros((4, h_pad, K), f32)
                .at[:, :H, :].set(w.reshape(4, H, K).astype(f32))
                .reshape(4 * h_pad, K))

    wih_p = pad_gate_rows(params["wih"])                                      # (4*h_pad, D)
    whh_p = jnp.zeros((4 * h_pad, h_pad), f32).at[:, :H].set(pad_gate_rows(params["whh"]))
    bias = (params["bih"] + params["bhh"]).astype(f32)
    bias_p = jnp.zeros((4, h_pad), f32).at[:, :H].set(bias.reshape(4, H)).reshape(4 * h_pad)

    # Hoisted input projection: pad x first so gx is emitted directly at its padded shape
    # (no second HBM round trip on the largest tensor).  bf16 inputs, f32 accumulation, bf16 stream.
    x_p = jnp.zeros((t_pad, b_pad, D), bf16).at[:T, :B].set(x.astype(bf16))
    gx = (jnp.einsum("tbd,gd->tbg", x_p, wih_p.astype(bf16),
                     preferred_element_type=f32) + bias_p).astype(bf16)        # (t_pad, b_pad, 4*h_pad)

    masks = (1.0 - on_reset).astype(f32)                                       # (T, B, 1)
    m_p = jnp.ones((t_pad, b_pad, 1), f32).at[:T, :B].set(masks)

    h0 = h[0].astype(f32)                                                      # (B, 2H) = (h | c)
    h0_p = (jnp.zeros((b_pad, 2 * h_pad), f32)
            .at[:B, :H].set(h0[:, :H])
            .at[:B, h_pad:h_pad + H].set(h0[:, H:]))

    # VMEM budget from the actual block sizes, capped to 3/4 of this generation's physical VMEM.
    f32b, b16b = 4, 2
    stream = 2 * tc * bb * (4 * h_pad * b16b + h_pad * b16b + f32b)            # gx + y + mask, x2 buf
    resident = (2 * h_pad * 4 * h_pad * b16b                                   # W_hh (bf16), x2 buf
                + 4 * bb * 2 * h_pad * f32b                                    # h0 + hout, x2 buf
                + bb * 2 * h_pad * f32b)                                       # state scratch
    vmem_limit = int(min(max(stream + resident + (4 << 20), 16 << 20), capacity * 3 // 4))

    call = _build_autoreset_lstm(T, b_pad, h_pad, bb, tc, n_c, vmem_limit)
    y_p, hout_p = call(gx, m_p, h0_p, whh_p.T.astype(bf16))

    y = y_p[:T, :B, :H]
    h_out = jnp.concatenate([hout_p[:B, :H], hout_p[:B, h_pad:h_pad + H]], axis=-1)
    return y.astype(x.dtype), h_out[None].astype(h.dtype)


# ---------------- pure-numpy reference (reproduces the PyTorch segmented loop) ----------------
def ref_forward(x, h, on_reset, params):
    x = np.asarray(x); h = np.asarray(h); on_reset = np.asarray(on_reset)
    wih = np.asarray(params["wih"]); whh = np.asarray(params["whh"])
    bih = np.asarray(params["bih"]); bhh = np.asarray(params["bhh"])
    T, B, D = x.shape
    H = whh.shape[1]

    def sigmoid(z):
        return 1.0 / (1.0 + np.exp(-z))

    def lstm_run(xs, hc):               # xs: (t, B, D), hc: (B, 2H)
        hs, cs = hc[:, :H].copy(), hc[:, H:].copy()
        outs = []
        for t in range(xs.shape[0]):
            gates = xs[t] @ wih.T + hs @ whh.T + bih + bhh
            i = sigmoid(gates[:, 0 * H:1 * H])
            f = sigmoid(gates[:, 1 * H:2 * H])
            g = np.tanh(gates[:, 2 * H:3 * H])
            o = sigmoid(gates[:, 3 * H:4 * H])
            cs = f * cs + i * g
            hs = o * np.tanh(cs)
            outs.append(hs)
        return np.stack(outs, 0), np.concatenate([hs, cs], -1)

    masks = 1.0 - on_reset                                         # (T, B, 1)
    hxs = h[0]                                                     # (B, 2H)
    has_zeros = np.nonzero(np.any(masks[1:, :, 0] == 0.0, axis=1))[0]
    idxs = [0] + (has_zeros + 1).tolist() + [T]
    outputs = []
    for i in range(len(idxs) - 1):
        s, e = idxs[i], idxs[i + 1]
        seg_out, hxs = lstm_run(x[s:e], hxs * masks[s])            # masks[s]: (B,1) broadcasts
        outputs.append(seg_out)
    return np.concatenate(outputs, 0), hxs[None]


if __name__ == "__main__":
    T, B, D, H = 8, 4, 16, 32
    key = jax.random.PRNGKey(0)
    k1, k2, k3, k4, k5, k6, k7 = jax.random.split(key, 7)

    bound = 1.0 / np.sqrt(H)   # PyTorch nn.LSTM default init: U(-1/sqrt(H), 1/sqrt(H))
    params = {
        "wih": jax.random.uniform(k1, (4 * H, D), jnp.float32, -bound, bound),
        "whh": jax.random.uniform(k2, (4 * H, H), jnp.float32, -bound, bound),
        "bih": jax.random.uniform(k3, (4 * H,), jnp.float32, -bound, bound),
        "bhh": jax.random.uniform(k4, (4 * H,), jnp.float32, -bound, bound),
    }

    x = jax.random.normal(k5, (T, B, D), jnp.float32)
    h = jax.random.normal(k6, (1, B, 2 * H), jnp.float32)
    on_reset = (jax.random.uniform(k7, (T, B, 1)) < 0.3).astype(jnp.float32)

    fwd = jax.jit(lambda a, b, c: autoreset_rnn_forward(a, b, c, params))
    y, h_out = fwd(x, h, on_reset)
    jax.block_until_ready((y, h_out))

    y_ref, h_ref = ref_forward(x, h, on_reset, params)
    # bf16 datapath (gx / y streaming + bf16 matmul operands, f32 accumulation) -> relaxed tolerance.
    np.testing.assert_allclose(np.asarray(y), y_ref, rtol=3e-2, atol=3e-2)
    np.testing.assert_allclose(np.asarray(h_out), h_ref, rtol=3e-2, atol=3e-2)

    print("KERNEL_OK")
</pallas_src>

<mosaic_0001>
module attributes {stable_mosaic.version = 11 : i64} {
  func.func @kernel(%arg0: i32, %arg1: i32, %arg2: memref<8x8x512xbf16, #tpu.memory_space<vmem>>, %arg3: memref<8x8x1xf32, #tpu.memory_space<vmem>>, %arg4: memref<8x256xf32, #tpu.memory_space<vmem>>, %arg5: memref<128x512xbf16, #tpu.memory_space<vmem>>, %arg6: memref<8x8x128xbf16, #tpu.memory_space<vmem>>, %arg7: memref<8x256xf32, #tpu.memory_space<vmem>>, %arg8: memref<8x256xf32, #tpu.memory_space<vmem>>) attributes {dimension_semantics = [#tpu.dimension_semantics<parallel>, #tpu.dimension_semantics<arbitrary>], iteration_bounds = array<i64: 1, 1>, scalar_prefetch = 0 : i64, scratch_operands = 1 : i64, tpu.core_type = #tpu.core_type<tc>, window_params = [{transform_indices = @transform_0, window_bounds = array<i64: 8, 8, 512>}, {transform_indices = @transform_1, window_bounds = array<i64: 8, 8, 1>}, {transform_indices = @transform_2, window_bounds = array<i64: 8, 256>}, {pipeline_mode = #tpu.pipeline_mode<synchronous>, transform_indices = @transform_3, window_bounds = array<i64: 128, 512>}, {transform_indices = @transform_4, window_bounds = array<i64: 8, 8, 128>}, {transform_indices = @transform_5, window_bounds = array<i64: 8, 256>}]} {
    %c0_i32 = arith.constant 0 : i32
    %0 = arith.cmpi eq, %arg1, %c0_i32 : i32
    %1 = arith.extui %0 : i1 to i32
    %c0_i32_0 = arith.constant 0 : i32
    %2 = arith.cmpi ne, %1, %c0_i32_0 : i32
    scf.if %2 {
      %c0_91 = arith.constant 0 : index
      %c0_92 = arith.constant 0 : index
      %363 = vector.load %arg4[%c0_91, %c0_92] : memref<8x256xf32, #tpu.memory_space<vmem>>, vector<8x256xf32>
      %c0_93 = arith.constant 0 : index
      %c0_94 = arith.constant 0 : index
      %364 = vector.load %arg8[%c0_93, %c0_94] : memref<8x256xf32, #tpu.memory_space<vmem>>, vector<8x256xf32>
      tpu.vector_store %arg8[%c0_93, %c0_94], %363 {strides = array<i32>} : memref<8x256xf32, #tpu.memory_space<vmem>>, vector<8x256xf32>,
    } else {
    }
    %c0 = arith.constant 0 : index
    %c0_1 = arith.constant 0 : index
    %3 = vector.load %arg5[%c0, %c0_1] : memref<128x512xbf16, #tpu.memory_space<vmem>>, vector<128x512xbf16>
    %c0_2 = arith.constant 0 : index
    %c0_3 = arith.constant 0 : index
    %4 = vector.load %arg8[%c0_2, %c0_3] : memref<8x256xf32, #tpu.memory_space<vmem>>, vector<8x128xf32>
    %c0_4 = arith.constant 0 : index
    %c128 = arith.constant 128 : index
    %5 = vector.load %arg8[%c0_4, %c128] : memref<8x256xf32, #tpu.memory_space<vmem>>, vector<8x128xf32>
    %c0_i32_5 = arith.constant 0 : i32
    %6 = arith.index_cast %c0_i32_5 : i32 to index
    %c0_6 = arith.constant 0 : index
    %c0_7 = arith.constant 0 : index
    %7 = vector.load %arg3[%6, %c0_6, %c0_7] : memref<8x8x1xf32, #tpu.memory_space<vmem>>, vector<1x8x1xf32>
    %8 = vector.shape_cast %7 : vector<1x8x1xf32> to vector<8x1xf32>
    %9 = vector.broadcast %8 : vector<8x1xf32> to vector<8x128xf32>
    %10 = arith.mulf %4, %9 : vector<8x128xf32>
    %11 = vector.broadcast %8 : vector<8x1xf32> to vector<8x128xf32>
    %12 = arith.mulf %5, %11 : vector<8x128xf32>
    %13 = arith.truncf %10 : vector<8x128xf32> to vector<8x128xbf16>
    %cst = arith.constant dense<0.000000e+00> : vector<8x512xf32>
    %14 = tpu.matmul %13, %3, %cst {dimension_numbers = #tpu.dot_dimension_numbers<[1], [0], [0], [1], [0, 0, 1, 1], [], []>} : vector<8x128xbf16>, vector<128x512xbf16>, vector<8x512xf32> -> vector<8x512xf32>
    %15 = arith.index_cast %c0_i32_5 : i32 to index
    %c0_8 = arith.constant 0 : index
    %c0_9 = arith.constant 0 : index
    %16 = vector.load %arg2[%15, %c0_8, %c0_9] : memref<8x8x512xbf16, #tpu.memory_space<vmem>>, vector<1x8x512xbf16>
    %17 = vector.shape_cast %16 : vector<1x8x512xbf16> to vector<8x512xbf16>
    %18 = arith.extf %17 : vector<8x512xbf16> to vector<8x512xf32>
    %19 = arith.addf %14, %18 : vector<8x512xf32>
    %20 = vector.extract_strided_slice %19 {offsets = [0, 0], sizes = [8, 128], strides = [1, 1]} : vector<8x512xf32> to vector<8x128xf32>
    %21 = arith.negf %20 : vector<8x128xf32>
    %22 = math.exp %21 : vector<8x128xf32>
    %cst_10 = arith.constant 1.000000e+00 : f32
    %23 = vector.broadcast %cst_10 : f32 to vector<8x128xf32>
    %24 = arith.addf %23, %22 : vector<8x128xf32>
    %25 = arith.divf %23, %24 : vector<8x128xf32>
    %26 = vector.extract_strided_slice %19 {offsets = [0, 128], sizes = [8, 128], strides = [1, 1]} : vector<8x512xf32> to vector<8x128xf32>
    %27 = arith.negf %26 : vector<8x128xf32>
    %28 = math.exp %27 : vector<8x128xf32>
    %cst_11 = arith.constant 1.000000e+00 : f32
    %29 = vector.broadcast %cst_11 : f32 to vector<8x128xf32>
    %30 = arith.addf %29, %28 : vector<8x128xf32>
    %31 = arith.divf %29, %30 : vector<8x128xf32>
    %32 = vector.extract_strided_slice %19 {offsets = [0, 256], sizes = [8, 128], strides = [1, 1]} : vector<8x512xf32> to vector<8x128xf32>
    %33 = math.tanh %32 : vector<8x128xf32>
    %34 = vector.extract_strided_slice %19 {offsets = [0, 384], sizes = [8, 128], strides = [1, 1]} : vector<8x512xf32> to vector<8x128xf32>
    %35 = arith.negf %34 : vector<8x128xf32>
    %36 = math.exp %35 : vector<8x128xf32>
    %cst_12 = arith.constant 1.000000e+00 : f32
    %37 = vector.broadcast %cst_12 : f32 to vector<8x128xf32>
    %38 = arith.addf %37, %36 : vector<8x128xf32>
    %39 = arith.divf %37, %38 : vector<8x128xf32>
    %40 = arith.mulf %31, %12 : vector<8x128xf32>
    %41 = arith.mulf %25, %33 : vector<8x128xf32>
    %42 = arith.addf %40, %41 : vector<8x128xf32>
    %43 = math.tanh %42 : vector<8x128xf32>
    %44 = arith.mulf %39, %43 : vector<8x128xf32>
    %45 = arith.truncf %44 : vector<8x128xf32> to vector<8x128xbf16>
    %46 = arith.index_cast %c0_i32_5 : i32 to index
    %c0_13 = arith.constant 0 : index
    %c0_14 = arith.constant 0 : index
    %47 = vector.load %arg6[%46, %c0_13, %c0_14] : memref<8x8x128xbf16, #tpu.memory_space<vmem>>, vector<1x8x128xbf16>
    %48 = vector.shape_cast %47 : vector<1x8x128xbf16> to vector<8x128xbf16>
    %49 = vector.shape_cast %45 : vector<8x128xbf16> to vector<1x8x128xbf16>
    tpu.vector_store %arg6[%46, %c0_13, %c0_14], %49 {strides = array<i32>} : memref<8x8x128xbf16, #tpu.memory_space<vmem>>, vector<1x8x128xbf16>,
    %c1_i32 = arith.constant 1 : i32
    %50 = arith.index_cast %c1_i32 : i32 to index
    %c0_15 = arith.constant 0 : index
    %c0_16 = arith.constant 0 : index
    %51 = vector.load %arg3[%50, %c0_15, %c0_16] : memref<8x8x1xf32, #tpu.memory_space<vmem>>, vector<1x8x1xf32>
    %52 = vector.shape_cast %51 : vector<1x8x1xf32> to vector<8x1xf32>
    %53 = vector.broadcast %52 : vector<8x1xf32> to vector<8x128xf32>
    %54 = arith.mulf %44, %53 : vector<8x128xf32>
    %55 = vector.broadcast %52 : vector<8x1xf32> to vector<8x128xf32>
    %56 = arith.mulf %42, %55 : vector<8x128xf32>
    %57 = arith.truncf %54 : vector<8x128xf32> to vector<8x128xbf16>
    %cst_17 = arith.constant dense<0.000000e+00> : vector<8x512xf32>
    %58 = tpu.matmul %57, %3, %cst_17 {dimension_numbers = #tpu.dot_dimension_numbers<[1], [0], [0], [1], [0, 0, 1, 1], [], []>} : vector<8x128xbf16>, vector<128x512xbf16>, vector<8x512xf32> -> vector<8x512xf32>
    %59 = arith.index_cast %c1_i32 : i32 to index
    %c0_18 = arith.constant 0 : index
    %c0_19 = arith.constant 0 : index
    %60 = vector.load %arg2[%59, %c0_18, %c0_19] : memref<8x8x512xbf16, #tpu.memory_space<vmem>>, vector<1x8x512xbf16>
    %61 = vector.shape_cast %60 : vector<1x8x512xbf16> to vector<8x512xbf16>
    %62 = arith.extf %61 : vector<8x512xbf16> to vector<8x512xf32>
    %63 = arith.addf %58, %62 : vector<8x512xf32>
    %64 = vector.extract_strided_slice %63 {offsets = [0, 0], sizes = [8, 128], strides = [1, 1]} : vector<8x512xf32> to vector<8x128xf32>
    %65 = arith.negf %64 : vector<8x128xf32>
    %66 = math.exp %65 : vector<8x128xf32>
    %cst_20 = arith.constant 1.000000e+00 : f32
    %67 = vector.broadcast %cst_20 : f32 to vector<8x128xf32>
    %68 = arith.addf %67, %66 : vector<8x128xf32>
    %69 = arith.divf %67, %68 : vector<8x128xf32>
    %70 = vector.extract_strided_slice %63 {offsets = [0, 128], sizes = [8, 128], strides = [1, 1]} : vector<8x512xf32> to vector<8x128xf32>
    %71 = arith.negf %70 : vector<8x128xf32>
    %72 = math.exp %71 : vector<8x128xf32>
    %cst_21 = arith.constant 1.000000e+00 : f32
    %73 = vector.broadcast %cst_21 : f32 to vector<8x128xf32>
    %74 = arith.addf %73, %72 : vector<8x128xf32>
    %75 = arith.divf %73, %74 : vector<8x128xf32>
    %76 = vector.extract_strided_slice %63 {offsets = [0, 256], sizes = [8, 128], strides = [1, 1]} : vector<8x512xf32> to vector<8x128xf32>
    %77 = math.tanh %76 : vector<8x128xf32>
    %78 = vector.extract_strided_slice %63 {offsets = [0, 384], sizes = [8, 128], strides = [1, 1]} : vector<8x512xf32> to vector<8x128xf32>
    %79 = arith.negf %78 : vector<8x128xf32>
    %80 = math.exp %79 : vector<8x128xf32>
    %cst_22 = arith.constant 1.000000e+00 : f32
    %81 = vector.broadcast %cst_22 : f32 to vector<8x128xf32>
    %82 = arith.addf %81, %80 : vector<8x128xf32>
    %83 = arith.divf %81, %82 : vector<8x128xf32>
    %84 = arith.mulf %75, %56 : vector<8x128xf32>
    %85 = arith.mulf %69, %77 : vector<8x128xf32>
    %86 = arith.addf %84, %85 : vector<8x128xf32>
    %87 = math.tanh %86 : vector<8x128xf32>
    %88 = arith.mulf %83, %87 : vector<8x128xf32>
    %89 = arith.truncf %88 : vector<8x128xf32> to vector<8x128xbf16>
    %90 = arith.index_cast %c1_i32 : i32 to index
    %c0_23 = arith.constant 0 : index
    %c0_24 = arith.constant 0 : index
    %91 = vector.load %arg6[%90, %c0_23, %c0_24] : memref<8x8x128xbf16, #tpu.memory_space<vmem>>, vector<1x8x128xbf16>
    %92 = vector.shape_cast %91 : vector<1x8x128xbf16> to vector<8x128xbf16>
    %93 = vector.shape_cast %89 : vector<8x128xbf16> to vector<1x8x128xbf16>
    tpu.vector_store %arg6[%90, %c0_23, %c0_24], %93 {strides = array<i32>} : memref<8x8x128xbf16, #tpu.memory_space<vmem>>, vector<1x8x128xbf16>,
    %c2_i32 = arith.constant 2 : i32
    %94 = arith.index_cast %c2_i32 : i32 to index
    %c0_25 = arith.constant 0 : index
    %c0_26 = arith.constant 0 : index
    %95 = vector.load %arg3[%94, %c0_25, %c0_26] : memref<8x8x1xf32, #tpu.memory_space<vmem>>, vector<1x8x1xf32>
    %96 = vector.shape_cast %95 : vector<1x8x1xf32> to vector<8x1xf32>
    %97 = vector.broadcast %96 : vector<8x1xf32> to vector<8x128xf32>
    %98 = arith.mulf %88, %97 : vector<8x128xf32>
    %99 = vector.broadcast %96 : vector<8x1xf32> to vector<8x128xf32>
    %100 = arith.mulf %86, %99 : vector<8x128xf32>
    %101 = arith.truncf %98 : vector<8x128xf32> to vector<8x128xbf16>
    %cst_27 = arith.constant dense<0.000000e+00> : vector<8x512xf32>
    %102 = tpu.matmul %101, %3, %cst_27 {dimension_numbers = #tpu.dot_dimension_numbers<[1], [0], [0], [1], [0, 0, 1, 1], [], []>} : vector<8x128xbf16>, vector<128x512xbf16>, vector<8x512xf32> -> vector<8x512xf32>
    %103 = arith.index_cast %c2_i32 : i32 to index
    %c0_28 = arith.constant 0 : index
    %c0_29 = arith.constant 0 : index
    %104 = vector.load %arg2[%103, %c0_28, %c0_29] : memref<8x8x512xbf16, #tpu.memory_space<vmem>>, vector<1x8x512xbf16>
    %105 = vector.shape_cast %104 : vector<1x8x512xbf16> to vector<8x512xbf16>
    %106 = arith.extf %105 : vector<8x512xbf16> to vector<8x512xf32>
    %107 = arith.addf %102, %106 : vector<8x512xf32>
    %108 = vector.extract_strided_slice %107 {offsets = [0, 0], sizes = [8, 128], strides = [1, 1]} : vector<8x512xf32> to vector<8x128xf32>
    %109 = arith.negf %108 : vector<8x128xf32>
    %110 = math.exp %109 : vector<8x128xf32>
    %cst_30 = arith.constant 1.000000e+00 : f32
    %111 = vector.broadcast %cst_30 : f32 to vector<8x128xf32>
    %112 = arith.addf %111, %110 : vector<8x128xf32>
    %113 = arith.divf %111, %112 : vector<8x128xf32>
    %114 = vector.extract_strided_slice %107 {offsets = [0, 128], sizes = [8, 128], strides = [1, 1]} : vector<8x512xf32> to vector<8x128xf32>
    %115 = arith.negf %114 : vector<8x128xf32>
    %116 = math.exp %115 : vector<8x128xf32>
    %cst_31 = arith.constant 1.000000e+00 : f32
    %117 = vector.broadcast %cst_31 : f32 to vector<8x128xf32>
    %118 = arith.addf %117, %116 : vector<8x128xf32>
    %119 = arith.divf %117, %118 : vector<8x128xf32>
    %120 = vector.extract_strided_slice %107 {offsets = [0, 256], sizes = [8, 128], strides = [1, 1]} : vector<8x512xf32> to vector<8x128xf32>
    %121 = math.tanh %120 : vector<8x128xf32>
    %122 = vector.extract_strided_slice %107 {offsets = [0, 384], sizes = [8, 128], strides = [1, 1]} : vector<8x512xf32> to vector<8x128xf32>
    %123 = arith.negf %122 : vector<8x128xf32>
    %124 = math.exp %123 : vector<8x128xf32>
    %cst_32 = arith.constant 1.000000e+00 : f32
    %125 = vector.broadcast %cst_32 : f32 to vector<8x128xf32>
    %126 = arith.addf %125, %124 : vector<8x128xf32>
    %127 = arith.divf %125, %126 : vector<8x128xf32>
    %128 = arith.mulf %119, %100 : vector<8x128xf32>
    %129 = arith.mulf %113, %121 : vector<8x128xf32>
    %130 = arith.addf %128, %129 : vector<8x128xf32>
    %131 = math.tanh %130 : vector<8x128xf32>
    %132 = arith.mulf %127, %131 : vector<8x128xf32>
    %133 = arith.truncf %132 : vector<8x128xf32> to vector<8x128xbf16>
    %134 = arith.index_cast %c2_i32 : i32 to index
    %c0_33 = arith.constant 0 : index
    %c0_34 = arith.constant 0 : index
    %135 = vector.load %arg6[%134, %c0_33, %c0_34] : memref<8x8x128xbf16, #tpu.memory_space<vmem>>, vector<1x8x128xbf16>
    %136 = vector.shape_cast %135 : vector<1x8x128xbf16> to vector<8x128xbf16>
    %137 = vector.shape_cast %133 : vector<8x128xbf16> to vector<1x8x128xbf16>
    tpu.vector_store %arg6[%134, %c0_33, %c0_34], %137 {strides = array<i32>} : memref<8x8x128xbf16, #tpu.memory_space<vmem>>, vector<1x8x128xbf16>,
    %c3_i32 = arith.constant 3 : i32
    %138 = arith.index_cast %c3_i32 : i32 to index
    %c0_35 = arith.constant 0 : index
    %c0_36 = arith.constant 0 : index
    %139 = vector.load %arg3[%138, %c0_35, %c0_36] : memref<8x8x1xf32, #tpu.memory_space<vmem>>, vector<1x8x1xf32>
    %140 = vector.shape_cast %139 : vector<1x8x1xf32> to vector<8x1xf32>
    %141 = vector.broadcast %140 : vector<8x1xf32> to vector<8x128xf32>
    %142 = arith.mulf %132, %141 : vector<8x128xf32>
    %143 = vector.broadcast %140 : vector<8x1xf32> to vector<8x128xf32>
    %144 = arith.mulf %130, %143 : vector<8x128xf32>
    %145 = arith.truncf %142 : vector<8x128xf32> to vector<8x128xbf16>
    %cst_37 = arith.constant dense<0.000000e+00> : vector<8x512xf32>
    %146 = tpu.matmul %145, %3, %cst_37 {dimension_numbers = #tpu.dot_dimension_numbers<[1], [0], [0], [1], [0, 0, 1, 1], [], []>} : vector<8x128xbf16>, vector<128x512xbf16>, vector<8x512xf32> -> vector<8x512xf32>
    %147 = arith.index_cast %c3_i32 : i32 to index
    %c0_38 = arith.constant 0 : index
    %c0_39 = arith.constant 0 : index
    %148 = vector.load %arg2[%147, %c0_38, %c0_39] : memref<8x8x512xbf16, #tpu.memory_space<vmem>>, vector<1x8x512xbf16>
    %149 = vector.shape_cast %148 : vector<1x8x512xbf16> to vector<8x512xbf16>
    %150 = arith.extf %149 : vector<8x512xbf16> to vector<8x512xf32>
    %151 = arith.addf %146, %150 : vector<8x512xf32>
    %152 = vector.extract_strided_slice %151 {offsets = [0, 0], sizes = [8, 128], strides = [1, 1]} : vector<8x512xf32> to vector<8x128xf32>
    %153 = arith.negf %152 : vector<8x128xf32>
    %154 = math.exp %153 : vector<8x128xf32>
    %cst_40 = arith.constant 1.000000e+00 : f32
    %155 = vector.broadcast %cst_40 : f32 to vector<8x128xf32>
    %156 = arith.addf %155, %154 : vector<8x128xf32>
    %157 = arith.divf %155, %156 : vector<8x128xf32>
    %158 = vector.extract_strided_slice %151 {offsets = [0, 128], sizes = [8, 128], strides = [1, 1]} : vector<8x512xf32> to vector<8x128xf32>
    %159 = arith.negf %158 : vector<8x128xf32>
    %160 = math.exp %159 : vector<8x128xf32>
    %cst_41 = arith.constant 1.000000e+00 : f32
    %161 = vector.broadcast %cst_41 : f32 to vector<8x128xf32>
    %162 = arith.addf %161, %160 : vector<8x128xf32>
    %163 = arith.divf %161, %162 : vector<8x128xf32>
    %164 = vector.extract_strided_slice %151 {offsets = [0, 256], sizes = [8, 128], strides = [1, 1]} : vector<8x512xf32> to vector<8x128xf32>
    %165 = math.tanh %164 : vector<8x128xf32>
    %166 = vector.extract_strided_slice %151 {offsets = [0, 384], sizes = [8, 128], strides = [1, 1]} : vector<8x512xf32> to vector<8x128xf32>
    %167 = arith.negf %166 : vector<8x128xf32>
    %168 = math.exp %167 : vector<8x128xf32>
    %cst_42 = arith.constant 1.000000e+00 : f32
    %169 = vector.broadcast %cst_42 : f32 to vector<8x128xf32>
    %170 = arith.addf %169, %168 : vector<8x128xf32>
    %171 = arith.divf %169, %170 : vector<8x128xf32>
    %172 = arith.mulf %163, %144 : vector<8x128xf32>
    %173 = arith.mulf %157, %165 : vector<8x128xf32>
    %174 = arith.addf %172, %173 : vector<8x128xf32>
    %175 = math.tanh %174 : vector<8x128xf32>
    %176 = arith.mulf %171, %175 : vector<8x128xf32>
    %177 = arith.truncf %176 : vector<8x128xf32> to vector<8x128xbf16>
    %178 = arith.index_cast %c3_i32 : i32 to index
    %c0_43 = arith.constant 0 : index
    %c0_44 = arith.constant 0 : index
    %179 = vector.load %arg6[%178, %c0_43, %c0_44] : memref<8x8x128xbf16, #tpu.memory_space<vmem>>, vector<1x8x128xbf16>
    %180 = vector.shape_cast %179 : vector<1x8x128xbf16> to vector<8x128xbf16>
    %181 = vector.shape_cast %177 : vector<8x128xbf16> to vector<1x8x128xbf16>
    tpu.vector_store %arg6[%178, %c0_43, %c0_44], %181 {strides = array<i32>} : memref<8x8x128xbf16, #tpu.memory_space<vmem>>, vector<1x8x128xbf16>,
    %c4_i32 = arith.constant 4 : i32
    %182 = arith.index_cast %c4_i32 : i32 to index
    %c0_45 = arith.constant 0 : index
    %c0_46 = arith.constant 0 : index
    %183 = vector.load %arg3[%182, %c0_45, %c0_46] : memref<8x8x1xf32, #tpu.memory_space<vmem>>, vector<1x8x1xf32>
    %184 = vector.shape_cast %183 : vector<1x8x1xf32> to vector<8x1xf32>
    %185 = vector.broadcast %184 : vector<8x1xf32> to vector<8x128xf32>
    %186 = arith.mulf %176, %185 : vector<8x128xf32>
    %187 = vector.broadcast %184 : vector<8x1xf32> to vector<8x128xf32>
    %188 = arith.mulf %174, %187 : vector<8x128xf32>
    %189 = arith.truncf %186 : vector<8x128xf32> to vector<8x128xbf16>
    %cst_47 = arith.constant dense<0.000000e+00> : vector<8x512xf32>
    %190 = tpu.matmul %189, %3, %cst_47 {dimension_numbers = #tpu.dot_dimension_numbers<[1], [0], [0], [1], [0, 0, 1, 1], [], []>} : vector<8x128xbf16>, vector<128x512xbf16>, vector<8x512xf32> -> vector<8x512xf32>
    %191 = arith.index_cast %c4_i32 : i32 to index
    %c0_48 = arith.constant 0 : index
    %c0_49 = arith.constant 0 : index
    %192 = vector.load %arg2[%191, %c0_48, %c0_49] : memref<8x8x512xbf16, #tpu.memory_space<vmem>>, vector<1x8x512xbf16>
    %193 = vector.shape_cast %192 : vector<1x8x512xbf16> to vector<8x512xbf16>
    %194 = arith.extf %193 : vector<8x512xbf16> to vector<8x512xf32>
    %195 = arith.addf %190, %194 : vector<8x512xf32>
    %196 = vector.extract_strided_slice %195 {offsets = [0, 0], sizes = [8, 128], strides = [1, 1]} : vector<8x512xf32> to vector<8x128xf32>
    %197 = arith.negf %196 : vector<8x128xf32>
    %198 = math.exp %197 : vector<8x128xf32>
    %cst_50 = arith.constant 1.000000e+00 : f32
    %199 = vector.broadcast %cst_50 : f32 to vector<8x128xf32>
    %200 = arith.addf %199, %198 : vector<8x128xf32>
    %201 = arith.divf %199, %200 : vector<8x128xf32>
    %202 = vector.extract_strided_slice %195 {offsets = [0, 128], sizes = [8, 128], strides = [1, 1]} : vector<8x512xf32> to vector<8x128xf32>
    %203 = arith.negf %202 : vector<8x128xf32>
    %204 = math.exp %203 : vector<8x128xf32>
    %cst_51 = arith.constant 1.000000e+00 : f32
    %205 = vector.broadcast %cst_51 : f32 to vector<8x128xf32>
    %206 = arith.addf %205, %204 : vector<8x128xf32>
    %207 = arith.divf %205, %206 : vector<8x128xf32>
    %208 = vector.extract_strided_slice %195 {offsets = [0, 256], sizes = [8, 128], strides = [1, 1]} : vector<8x512xf32> to vector<8x128xf32>
    %209 = math.tanh %208 : vector<8x128xf32>
    %210 = vector.extract_strided_slice %195 {offsets = [0, 384], sizes = [8, 128], strides = [1, 1]} : vector<8x512xf32> to vector<8x128xf32>
    %211 = arith.negf %210 : vector<8x128xf32>
    %212 = math.exp %211 : vector<8x128xf32>
    %cst_52 = arith.constant 1.000000e+00 : f32
    %213 = vector.broadcast %cst_52 : f32 to vector<8x128xf32>
    %214 = arith.addf %213, %212 : vector<8x128xf32>
    %215 = arith.divf %213, %214 : vector<8x128xf32>
    %216 = arith.mulf %207, %188 : vector<8x128xf32>
    %217 = arith.mulf %201, %209 : vector<8x128xf32>
    %218 = arith.addf %216, %217 : vector<8x128xf32>
    %219 = math.tanh %218 : vector<8x128xf32>
    %220 = arith.mulf %215, %219 : vector<8x128xf32>
    %221 = arith.truncf %220 : vector<8x128xf32> to vector<8x128xbf16>
    %222 = arith.index_cast %c4_i32 : i32 to index
    %c0_53 = arith.constant 0 : index
    %c0_54 = arith.constant 0 : index
    %223 = vector.load %arg6[%222, %c0_53, %c0_54] : memref<8x8x128xbf16, #tpu.memory_space<vmem>>, vector<1x8x128xbf16>
    %224 = vector.shape_cast %223 : vector<1x8x128xbf16> to vector<8x128xbf16>
    %225 = vector.shape_cast %221 : vector<8x128xbf16> to vector<1x8x128xbf16>
    tpu.vector_store %arg6[%222, %c0_53, %c0_54], %225 {strides = array<i32>} : memref<8x8x128xbf16, #tpu.memory_space<vmem>>, vector<1x8x128xbf16>,
    %c5_i32 = arith.constant 5 : i32
    %226 = arith.index_cast %c5_i32 : i32 to index
    %c0_55 = arith.constant 0 : index
    %c0_56 = arith.constant 0 : index
    %227 = vector.load %arg3[%226, %c0_55, %c0_56] : memref<8x8x1xf32, #tpu.memory_space<vmem>>, vector<1x8x1xf32>
    %228 = vector.shape_cast %227 : vector<1x8x1xf32> to vector<8x1xf32>
    %229 = vector.broadcast %228 : vector<8x1xf32> to vector<8x128xf32>
    %230 = arith.mulf %220, %229 : vector<8x128xf32>
    %231 = vector.broadcast %228 : vector<8x1xf32> to vector<8x128xf32>
    %232 = arith.mulf %218, %231 : vector<8x128xf32>
    %233 = arith.truncf %230 : vector<8x128xf32> to vector<8x128xbf16>
    %cst_57 = arith.constant dense<0.000000e+00> : vector<8x512xf32>
    %234 = tpu.matmul %233, %3, %cst_57 {dimension_numbers = #tpu.dot_dimension_numbers<[1], [0], [0], [1], [0, 0, 1, 1], [], []>} : vector<8x128xbf16>, vector<128x512xbf16>, vector<8x512xf32> -> vector<8x512xf32>
    %235 = arith.index_cast %c5_i32 : i32 to index
    %c0_58 = arith.constant 0 : index
    %c0_59 = arith.constant 0 : index
    %236 = vector.load %arg2[%235, %c0_58, %c0_59] : memref<8x8x512xbf16, #tpu.memory_space<vmem>>, vector<1x8x512xbf16>
    %237 = vector.shape_cast %236 : vector<1x8x512xbf16> to vector<8x512xbf16>
    %238 = arith.extf %237 : vector<8x512xbf16> to vector<8x512xf32>
    %239 = arith.addf %234, %238 : vector<8x512xf32>
    %240 = vector.extract_strided_slice %239 {offsets = [0, 0], sizes = [8, 128], strides = [1, 1]} : vector<8x512xf32> to vector<8x128xf32>
    %241 = arith.negf %240 : vector<8x128xf32>
    %242 = math.exp %241 : vector<8x128xf32>
    %cst_60 = arith.constant 1.000000e+00 : f32
    %243 = vector.broadcast %cst_60 : f32 to vector<8x128xf32>
    %244 = arith.addf %243, %242 : vector<8x128xf32>
    %245 = arith.divf %243, %244 : vector<8x128xf32>
    %246 = vector.extract_strided_slice %239 {offsets = [0, 128], sizes = [8, 128], strides = [1, 1]} : vector<8x512xf32> to vector<8x128xf32>
    %247 = arith.negf %246 : vector<8x128xf32>
    %248 = math.exp %247 : vector<8x128xf32>
    %cst_61 = arith.constant 1.000000e+00 : f32
    %249 = vector.broadcast %cst_61 : f32 to vector<8x128xf32>
    %250 = arith.addf %249, %248 : vector<8x128xf32>
    %251 = arith.divf %249, %250 : vector<8x128xf32>
    %252 = vector.extract_strided_slice %239 {offsets = [0, 256], sizes = [8, 128], strides = [1, 1]} : vector<8x512xf32> to vector<8x128xf32>
    %253 = math.tanh %252 : vector<8x128xf32>
    %254 = vector.extract_strided_slice %239 {offsets = [0, 384], sizes = [8, 128], strides = [1, 1]} : vector<8x512xf32> to vector<8x128xf32>
    %255 = arith.negf %254 : vector<8x128xf32>
    %256 = math.exp %255 : vector<8x128xf32>
    %cst_62 = arith.constant 1.000000e+00 : f32
    %257 = vector.broadcast %cst_62 : f32 to vector<8x128xf32>
    %258 = arith.addf %257, %256 : vector<8x128xf32>
    %259 = arith.divf %257, %258 : vector<8x128xf32>
    %260 = arith.mulf %251, %232 : vector<8x128xf32>
    %261 = arith.mulf %245, %253 : vector<8x128xf32>
    %262 = arith.addf %260, %261 : vector<8x128xf32>
    %263 = math.tanh %262 : vector<8x128xf32>
    %264 = arith.mulf %259, %263 : vector<8x128xf32>
    %265 = arith.truncf %264 : vector<8x128xf32> to vector<8x128xbf16>
    %266 = arith.index_cast %c5_i32 : i32 to index
    %c0_63 = arith.constant 0 : index
    %c0_64 = arith.constant 0 : index
    %267 = vector.load %arg6[%266, %c0_63, %c0_64] : memref<8x8x128xbf16, #tpu.memory_space<vmem>>, vector<1x8x128xbf16>
    %268 = vector.shape_cast %267 : vector<1x8x128xbf16> to vector<8x128xbf16>
    %269 = vector.shape_cast %265 : vector<8x128xbf16> to vector<1x8x128xbf16>
    tpu.vector_store %arg6[%266, %c0_63, %c0_64], %269 {strides = array<i32>} : memref<8x8x128xbf16, #tpu.memory_space<vmem>>, vector<1x8x128xbf16>,
    %c6_i32 = arith.constant 6 : i32
    %270 = arith.index_cast %c6_i32 : i32 to index
    %c0_65 = arith.constant 0 : index
    %c0_66 = arith.constant 0 : index
    %271 = vector.load %arg3[%270, %c0_65, %c0_66] : memref<8x8x1xf32, #tpu.memory_space<vmem>>, vector<1x8x1xf32>
    %272 = vector.shape_cast %271 : vector<1x8x1xf32> to vector<8x1xf32>
    %273 = vector.broadcast %272 : vector<8x1xf32> to vector<8x128xf32>
    %274 = arith.mulf %264, %273 : vector<8x128xf32>
    %275 = vector.broadcast %272 : vector<8x1xf32> to vector<8x128xf32>
    %276 = arith.mulf %262, %275 : vector<8x128xf32>
    %277 = arith.truncf %274 : vector<8x128xf32> to vector<8x128xbf16>
    %cst_67 = arith.constant dense<0.000000e+00> : vector<8x512xf32>
    %278 = tpu.matmul %277, %3, %cst_67 {dimension_numbers = #tpu.dot_dimension_numbers<[1], [0], [0], [1], [0, 0, 1, 1], [], []>} : vector<8x128xbf16>, vector<128x512xbf16>, vector<8x512xf32> -> vector<8x512xf32>
    %279 = arith.index_cast %c6_i32 : i32 to index
    %c0_68 = arith.constant 0 : index
    %c0_69 = arith.constant 0 : index
    %280 = vector.load %arg2[%279, %c0_68, %c0_69] : memref<8x8x512xbf16, #tpu.memory_space<vmem>>, vector<1x8x512xbf16>
    %281 = vector.shape_cast %280 : vector<1x8x512xbf16> to vector<8x512xbf16>
    %282 = arith.extf %281 : vector<8x512xbf16> to vector<8x512xf32>
    %283 = arith.addf %278, %282 : vector<8x512xf32>
    %284 = vector.extract_strided_slice %283 {offsets = [0, 0], sizes = [8, 128], strides = [1, 1]} : vector<8x512xf32> to vector<8x128xf32>
    %285 = arith.negf %284 : vector<8x128xf32>
    %286 = math.exp %285 : vector<8x128xf32>
    %cst_70 = arith.constant 1.000000e+00 : f32
    %287 = vector.broadcast %cst_70 : f32 to vector<8x128xf32>
    %288 = arith.addf %287, %286 : vector<8x128xf32>
    %289 = arith.divf %287, %288 : vector<8x128xf32>
    %290 = vector.extract_strided_slice %283 {offsets = [0, 128], sizes = [8, 128], strides = [1, 1]} : vector<8x512xf32> to vector<8x128xf32>
    %291 = arith.negf %290 : vector<8x128xf32>
    %292 = math.exp %291 : vector<8x128xf32>
    %cst_71 = arith.constant 1.000000e+00 : f32
    %293 = vector.broadcast %cst_71 : f32 to vector<8x128xf32>
    %294 = arith.addf %293, %292 : vector<8x128xf32>
    %295 = arith.divf %293, %294 : vector<8x128xf32>
    %296 = vector.extract_strided_slice %283 {offsets = [0, 256], sizes = [8, 128], strides = [1, 1]} : vector<8x512xf32> to vector<8x128xf32>
    %297 = math.tanh %296 : vector<8x128xf32>
    %298 = vector.extract_strided_slice %283 {offsets = [0, 384], sizes = [8, 128], strides = [1, 1]} : vector<8x512xf32> to vector<8x128xf32>
    %299 = arith.negf %298 : vector<8x128xf32>
    %300 = math.exp %299 : vector<8x128xf32>
    %cst_72 = arith.constant 1.000000e+00 : f32
    %301 = vector.broadcast %cst_72 : f32 to vector<8x128xf32>
    %302 = arith.addf %301, %300 : vector<8x128xf32>
    %303 = arith.divf %301, %302 : vector<8x128xf32>
    %304 = arith.mulf %295, %276 : vector<8x128xf32>
    %305 = arith.mulf %289, %297 : vector<8x128xf32>
    %306 = arith.addf %304, %305 : vector<8x128xf32>
    %307 = math.tanh %306 : vector<8x128xf32>
    %308 = arith.mulf %303, %307 : vector<8x128xf32>
    %309 = arith.truncf %308 : vector<8x128xf32> to vector<8x128xbf16>
    %310 = arith.index_cast %c6_i32 : i32 to index
    %c0_73 = arith.constant 0 : index
    %c0_74 = arith.constant 0 : index
    %311 = vector.load %arg6[%310, %c0_73, %c0_74] : memref<8x8x128xbf16, #tpu.memory_space<vmem>>, vector<1x8x128xbf16>
    %312 = vector.shape_cast %311 : vector<1x8x128xbf16> to vector<8x128xbf16>
    %313 = vector.shape_cast %309 : vector<8x128xbf16> to vector<1x8x128xbf16>
    tpu.vector_store %arg6[%310, %c0_73, %c0_74], %313 {strides = array<i32>} : memref<8x8x128xbf16, #tpu.memory_space<vmem>>, vector<1x8x128xbf16>,
    %c7_i32 = arith.constant 7 : i32
    %314 = arith.index_cast %c7_i32 : i32 to index
    %c0_75 = arith.constant 0 : index
    %c0_76 = arith.constant 0 : index
    %315 = vector.load %arg3[%314, %c0_75, %c0_76] : memref<8x8x1xf32, #tpu.memory_space<vmem>>, vector<1x8x1xf32>
    %316 = vector.shape_cast %315 : vector<1x8x1xf32> to vector<8x1xf32>
    %317 = vector.broadcast %316 : vector<8x1xf32> to vector<8x128xf32>
    %318 = arith.mulf %308, %317 : vector<8x128xf32>
    %319 = vector.broadcast %316 : vector<8x1xf32> to vector<8x128xf32>
    %320 = arith.mulf %306, %319 : vector<8x128xf32>
    %321 = arith.truncf %318 : vector<8x128xf32> to vector<8x128xbf16>
    %cst_77 = arith.constant dense<0.000000e+00> : vector<8x512xf32>
    %322 = tpu.matmul %321, %3, %cst_77 {dimension_numbers = #tpu.dot_dimension_numbers<[1], [0], [0], [1], [0, 0, 1, 1], [], []>} : vector<8x128xbf16>, vector<128x512xbf16>, vector<8x512xf32> -> vector<8x512xf32>
    %323 = arith.index_cast %c7_i32 : i32 to index
    %c0_78 = arith.constant 0 : index
    %c0_79 = arith.constant 0 : index
    %324 = vector.load %arg2[%323, %c0_78, %c0_79] : memref<8x8x512xbf16, #tpu.memory_space<vmem>>, vector<1x8x512xbf16>
    %325 = vector.shape_cast %324 : vector<1x8x512xbf16> to vector<8x512xbf16>
    %326 = arith.extf %325 : vector<8x512xbf16> to vector<8x512xf32>
    %327 = arith.addf %322, %326 : vector<8x512xf32>
    %328 = vector.extract_strided_slice %327 {offsets = [0, 0], sizes = [8, 128], strides = [1, 1]} : vector<8x512xf32> to vector<8x128xf32>
    %329 = arith.negf %328 : vector<8x128xf32>
    %330 = math.exp %329 : vector<8x128xf32>
    %cst_80 = arith.constant 1.000000e+00 : f32
    %331 = vector.broadcast %cst_80 : f32 to vector<8x128xf32>
    %332 = arith.addf %331, %330 : vector<8x128xf32>
    %333 = arith.divf %331, %332 : vector<8x128xf32>
    %334 = vector.extract_strided_slice %327 {offsets = [0, 128], sizes = [8, 128], strides = [1, 1]} : vector<8x512xf32> to vector<8x128xf32>
    %335 = arith.negf %334 : vector<8x128xf32>
    %336 = math.exp %335 : vector<8x128xf32>
    %cst_81 = arith.constant 1.000000e+00 : f32
    %337 = vector.broadcast %cst_81 : f32 to vector<8x128xf32>
    %338 = arith.addf %337, %336 : vector<8x128xf32>
    %339 = arith.divf %337, %338 : vector<8x128xf32>
    %340 = vector.extract_strided_slice %327 {offsets = [0, 256], sizes = [8, 128], strides = [1, 1]} : vector<8x512xf32> to vector<8x128xf32>
    %341 = math.tanh %340 : vector<8x128xf32>
    %342 = vector.extract_strided_slice %327 {offsets = [0, 384], sizes = [8, 128], strides = [1, 1]} : vector<8x512xf32> to vector<8x128xf32>
    %343 = arith.negf %342 : vector<8x128xf32>
    %344 = math.exp %343 : vector<8x128xf32>
    %cst_82 = arith.constant 1.000000e+00 : f32
    %345 = vector.broadcast %cst_82 : f32 to vector<8x128xf32>
    %346 = arith.addf %345, %344 : vector<8x128xf32>
    %347 = arith.divf %345, %346 : vector<8x128xf32>
    %348 = arith.mulf %339, %320 : vector<8x128xf32>
    %349 = arith.mulf %333, %341 : vector<8x128xf32>
    %350 = arith.addf %348, %349 : vector<8x128xf32>
    %351 = math.tanh %350 : vector<8x128xf32>
    %352 = arith.mulf %347, %351 : vector<8x128xf32>
    %353 = arith.truncf %352 : vector<8x128xf32> to vector<8x128xbf16>
    %354 = arith.index_cast %c7_i32 : i32 to index
    %c0_83 = arith.constant 0 : index
    %c0_84 = arith.constant 0 : index
    %355 = vector.load %arg6[%354, %c0_83, %c0_84] : memref<8x8x128xbf16, #tpu.memory_space<vmem>>, vector<1x8x128xbf16>
    %356 = vector.shape_cast %355 : vector<1x8x128xbf16> to vector<8x128xbf16>
    %357 = vector.shape_cast %353 : vector<8x128xbf16> to vector<1x8x128xbf16>
    tpu.vector_store %arg6[%354, %c0_83, %c0_84], %357 {strides = array<i32>} : memref<8x8x128xbf16, #tpu.memory_space<vmem>>, vector<1x8x128xbf16>,
    %c8_i32 = arith.constant 8 : i32
    %c0_85 = arith.constant 0 : index
    %c0_86 = arith.constant 0 : index
    %358 = vector.load %arg8[%c0_85, %c0_86] : memref<8x256xf32, #tpu.memory_space<vmem>>, vector<8x128xf32>
    tpu.vector_store %arg8[%c0_85, %c0_86], %352 {strides = array<i32>} : memref<8x256xf32, #tpu.memory_space<vmem>>, vector<8x128xf32>,
    %c0_87 = arith.constant 0 : index
    %c128_88 = arith.constant 128 : index
    %359 = vector.load %arg8[%c0_87, %c128_88] : memref<8x256xf32, #tpu.memory_space<vmem>>, vector<8x128xf32>
    tpu.vector_store %arg8[%c0_87, %c128_88], %350 {strides = array<i32>} : memref<8x256xf32, #tpu.memory_space<vmem>>, vector<8x128xf32>,
    %c0_i32_89 = arith.constant 0 : i32
    %360 = arith.cmpi eq, %arg1, %c0_i32_89 : i32
    %361 = arith.extui %360 : i1 to i32
    %c0_i32_90 = arith.constant 0 : i32
    %362 = arith.cmpi ne, %361, %c0_i32_90 : i32
    scf.if %362 {
      %c0_91 = arith.constant 0 : index
      %c0_92 = arith.constant 0 : index
      %363 = vector.load %arg8[%c0_91, %c0_92] : memref<8x256xf32, #tpu.memory_space<vmem>>, vector<8x256xf32>
      %c0_93 = arith.constant 0 : index
      %c0_94 = arith.constant 0 : index
      %364 = vector.load %arg7[%c0_93, %c0_94] : memref<8x256xf32, #tpu.memory_space<vmem>>, vector<8x256xf32>
      tpu.vector_store %arg7[%c0_93, %c0_94], %363 {strides = array<i32>} : memref<8x256xf32, #tpu.memory_space<vmem>>, vector<8x256xf32>,
    } else {
    }
    return
  }
  func.func @transform_0(%arg0: i32, %arg1: i32) -> (i32, i32, i32) {
    %c0_i32 = arith.constant 0 : i32
    %c0_i32_0 = arith.constant 0 : i32
    return %arg1, %arg0, %c0_i32 : i32, i32, i32
  }
  func.func @transform_1(%arg0: i32, %arg1: i32) -> (i32, i32, i32) {
    %c0_i32 = arith.constant 0 : i32
    %c0_i32_0 = arith.constant 0 : i32
    return %arg1, %arg0, %c0_i32 : i32, i32, i32
  }
  func.func @transform_2(%arg0: i32, %arg1: i32) -> (i32, i32) {
    %c0_i32 = arith.constant 0 : i32
    %c0_i32_0 = arith.constant 0 : i32
    return %arg0, %c0_i32 : i32, i32
  }
  func.func @transform_3(%arg0: i32, %arg1: i32) -> (i32, i32) {
    %c0_i32 = arith.constant 0 : i32
    %c0_i32_0 = arith.constant 0 : i32
    %c0_i32_1 = arith.constant 0 : i32
    return %c0_i32, %c0_i32_0 : i32, i32
  }
  func.func @transform_4(%arg0: i32, %arg1: i32) -> (i32, i32, i32) {
    %c0_i32 = arith.constant 0 : i32
    %c0_i32_0 = arith.constant 0 : i32
    return %arg1, %arg0, %c0_i32 : i32, i32, i32
  }
  func.func @transform_5(%arg0: i32, %arg1: i32) -> (i32, i32) {
    %c0_i32 = arith.constant 0 : i32
    %c0_i32_0 = arith.constant 0 : i32
    return %arg0, %c0_i32 : i32, i32
  }
}

</mosaic_0001>

<llo_original>
// kernel: _lambda_.1
$region0: #{_lambda_.1}
  #allocation0 [shape = 'u32[]', space=smem, size = 0x4, offset = 0x4, fixed_abs, tag = 'smem constant byte address 0x4 - core index']
  #allocation1 [shape = 'u32[72,128]{1,0:T(1,128)}', space=vmem, size = 0x9000, scoped, tag = 'internal scratch']
  #allocation2 [shape = 'f32[8,256]{1,0:T(8,128)}', space=vmem, size = 0x2000, scoped, tag = 'scratch operand']
  %s0 = inlined_call_operand.vmem [shape: bf16[8,8,512], index: 0, kind: input, shape index: {}]
  %s1 = inlined_call_operand.vmem [shape: f32[8,8,1], index: 1, kind: input, shape index: {}]
  %s2 = inlined_call_operand.vmem [shape: f32[8,256], index: 2, kind: input, shape index: {}]
  %s3 = inlined_call_operand.vmem [shape: bf16[128,512], index: 3, kind: input, shape index: {}]
  %s4 = inlined_call_operand.vmem [shape: bf16[8,8,128], index: 4, kind: output, shape index: {0}]
  %s5 = inlined_call_operand.vmem [shape: f32[8,256], index: 5, kind: output, shape index: {1}]
  %6 = xla_tuple %s4, %s5
  %s7 = sld [smem:[#allocation0]]
  $region42: #{_lambda_.1} parent=0
    _
  %s9 = ssub.s32 1, %s7
  %s10 = scalar_select 0, %s9, %s7
  // Predicated region
  $region2: #{_lambda_.1} parent=0 // pred_check
    _
  $region3: #{_lambda_.1} parent=0 // pred_check_branch
    %12 = sbr.rel (0) target = $region5
  $region4: #{_lambda_.1} parent=0 // pred_region
    _
  $region5: #{_lambda_.1} parent=0 // pred_fallthru
    _
  // Predicated region
  $region6: #{_lambda_.1} parent=0 // pred_check
    _
  $region7: #{_lambda_.1} parent=0 // pred_check_branch
    %14 = sbr.rel (0) target = $region9
  $region8: #{_lambda_.1} parent=0 // pred_region
    _
  $region9: #{_lambda_.1} parent=0 // pred_fallthru
    _
  // Predicated region
  $region10: #{_lambda_.1} parent=0 // pred_check
    _
  $region11: #{_lambda_.1} parent=0 // pred_check_branch
    %16 = sbr.rel (0) target = $region13
  $region12: #{_lambda_.1} parent=0 // pred_region
    _
  $region13: #{_lambda_.1} parent=0 // pred_fallthru
    _
  // Predicated region
  $region14: #{_lambda_.1} parent=0 // pred_check
    _
  $region15: #{_lambda_.1} parent=0 // pred_check_branch
    %18 = sbr.rel (0) target = $region17
  $region16: #{_lambda_.1} parent=0 // pred_region
    _
  $region17: #{_lambda_.1} parent=0 // pred_fallthru
    _
  %p19 = scmp.eq.s32.totalorder 0, 0
  // Predicated region
  $region18: #{_lambda_.1} parent=0 // pred_check
    %p20 = pneg %p19
  $region19: #{_lambda_.1} parent=0 // pred_check_branch
    %22 = sbr.rel (%p20) target = $region21
  $region20: #{_lambda_.1} parent=0 // pred_region
    %v23 = vld [vmem:[%s2] sm:$0xff]
    %v24 = vld [vmem:[%s2 + $0x8] sm:$0xff]
    %25 = vst [vmem:[#allocation2] sm:$0xff] %v23
    %26 = vst [vmem:[#allocation2 + $0x8] sm:$0xff] %v24
  $region21: #{_lambda_.1} parent=0 // pred_fallthru
    _
  %v27 = vld [vmem:[%s3] sm:$0xff]
  %v28 = vld [vmem:[%s3 + $0x8] sm:$0xff]
  %v29 = vld [vmem:[%s3 + $0x10] sm:$0xff]
  %v30 = vld [vmem:[%s3 + $0x18] sm:$0xff]
  %v31 = vld [vmem:[%s3 + $0x20] sm:$0xff]
  %v32 = vld [vmem:[%s3 + $0x28] sm:$0xff]
  %v33 = vld [vmem:[%s3 + $0x30] sm:$0xff]
  %v34 = vld [vmem:[%s3 + $0x38] sm:$0xff]
  %v35 = vld [vmem:[%s3 + $0x40] sm:$0xff]
  %v36 = vld [vmem:[%s3 + $0x48] sm:$0xff]
  %v37 = vld [vmem:[%s3 + $0x50] sm:$0xff]
  %v38 = vld [vmem:[%s3 + $0x58] sm:$0xff]
  %v39 = vld [vmem:[%s3 + $0x60] sm:$0xff]
  %v40 = vld [vmem:[%s3 + $0x68] sm:$0xff]
  %v41 = vld [vmem:[%s3 + $0x70] sm:$0xff]
  %v42 = vld [vmem:[%s3 + $0x78] sm:$0xff]
  %v43 = vld [vmem:[%s3 + $0x80] sm:$0xff]
  %v44 = vld [vmem:[%s3 + $0x88] sm:$0xff]
  %v45 = vld [vmem:[%s3 + $0x90] sm:$0xff]
  %v46 = vld [vmem:[%s3 + $0x98] sm:$0xff]
  %v47 = vld [vmem:[%s3 + $0xa0] sm:$0xff]
  %v48 = vld [vmem:[%s3 + $0xa8] sm:$0xff]
  %v49 = vld [vmem:[%s3 + $0xb0] sm:$0xff]
  %v50 = vld [vmem:[%s3 + $0xb8] sm:$0xff]
  %v51 = vld [vmem:[%s3 + $0xc0] sm:$0xff]
  %v52 = vld [vmem:[%s3 + $0xc8] sm:$0xff]
  %v53 = vld [vmem:[%s3 + $0xd0] sm:$0xff]
  %v54 = vld [vmem:[%s3 + $0xd8] sm:$0xff]
  %v55 = vld [vmem:[%s3 + $0xe0] sm:$0xff]
  %v56 = vld [vmem:[%s3 + $0xe8] sm:$0xff]
  %v57 = vld [vmem:[%s3 + $0xf0] sm:$0xff]
  %v58 = vld [vmem:[%s3 + $0xf8] sm:$0xff]
  %v59 = vld [vmem:[#allocation2] sm:$0xff]
  %v60 = vld [vmem:[#allocation2 + $0x8] sm:$0xff]
  %v61 = vld [vmem:[%s1] sm:$0xff]
  %63 = vset.pattern.permute.xlu0 0
  %64 = vperm.xlu0 %63, %v61
  %v65 = vpop.permute.xlu0 %64
  %v67 = vmul.f32 %v59, %v65
  %v68 = vmul.f32 %v60, %v65
  %v69 = vpack.c.bf16 %v67, %v67
  %v70 = vld [vmem:[%s0] sm:$0xff]
  %v71 = vld [vmem:[%s0 + $0x8] sm:$0xff]
  %v72 = vunpack.c.l.bf16 %v70
  %v73 = vunpack.c.h.bf16 %v70
  %v74 = vunpack.c.l.bf16 %v71
  %v75 = vunpack.c.h.bf16 %v71
  %v108 = vunpack.c.l.b16 %v27
  %v109 = vunpack.c.h.b16 %v27
  %v110 = vunpack.c.l.b16 %v28
  %v111 = vunpack.c.h.b16 %v28
  %v112 = vunpack.c.l.b16 %v29
  %v113 = vunpack.c.h.b16 %v29
  %v114 = vunpack.c.l.b16 %v30
  %v115 = vunpack.c.h.b16 %v30
  %v116 = vunpack.c.l.b16 %v31
  %v117 = vunpack.c.h.b16 %v31
  %v118 = vunpack.c.l.b16 %v32
  %v119 = vunpack.c.h.b16 %v32
  %v120 = vunpack.c.l.b16 %v33
  %v121 = vunpack.c.h.b16 %v33
  %v122 = vunpack.c.l.b16 %v34
  %v123 = vunpack.c.h.b16 %v34
  %v124 = vunpack.c.l.b16 %v35
  %v125 = vunpack.c.h.b16 %v35
  %v126 = vunpack.c.l.b16 %v36
  %v127 = vunpack.c.h.b16 %v36
  %v128 = vunpack.c.l.b16 %v37
  %v129 = vunpack.c.h.b16 %v37
  %v130 = vunpack.c.l.b16 %v38
  %v131 = vunpack.c.h.b16 %v38
  %v132 = vunpack.c.l.b16 %v39
  %v133 = vunpack.c.h.b16 %v39
  %v134 = vunpack.c.l.b16 %v40
  %v135 = vunpack.c.h.b16 %v40
  %v136 = vunpack.c.l.b16 %v41
  %v137 = vunpack.c.h.b16 %v41
  %v138 = vunpack.c.l.b16 %v42
  %v139 = vunpack.c.h.b16 %v42
  %v140 = vunpack.c.l.b16 %v43
  %v141 = vunpack.c.h.b16 %v43
  %v142 = vunpack.c.l.b16 %v44
  %v143 = vunpack.c.h.b16 %v44
  %v144 = vunpack.c.l.b16 %v45
  %v145 = vunpack.c.h.b16 %v45
  %v146 = vunpack.c.l.b16 %v46
  %v147 = vunpack.c.h.b16 %v46
  %v148 = vunpack.c.l.b16 %v47
  %v149 = vunpack.c.h.b16 %v47
  %v150 = vunpack.c.l.b16 %v48
  %v151 = vunpack.c.h.b16 %v48
  %v152 = vunpack.c.l.b16 %v49
  %v153 = vunpack.c.h.b16 %v49
  %v154 = vunpack.c.l.b16 %v50
  %v155 = vunpack.c.h.b16 %v50
  %v156 = vunpack.c.l.b16 %v51
  %v157 = vunpack.c.h.b16 %v51
  %v158 = vunpack.c.l.b16 %v52
  %v159 = vunpack.c.h.b16 %v52
  %v160 = vunpack.c.l.b16 %v53
  %v161 = vunpack.c.h.b16 %v53
  %v162 = vunpack.c.l.b16 %v54
  %v163 = vunpack.c.h.b16 %v54
  %v164 = vunpack.c.l.b16 %v55
  %v165 = vunpack.c.h.b16 %v55
  %v166 = vunpack.c.l.b16 %v56
  %v167 = vunpack.c.h.b16 %v56
  %v168 = vunpack.c.l.b16 %v57
  %v169 = vunpack.c.h.b16 %v57
  %v170 = vunpack.c.l.b16 %v58
  %v171 = vunpack.c.h.b16 %v58
  %v172 = vpack.c.b16 %v112, %v108
  %v173 = vpack.c.b16 %v113, %v109
  %v174 = vpack.c.b16 %v114, %v110
  %v175 = vpack.c.b16 %v115, %v111
  %v176 = vpack.c.b16 %v120, %v116
  %v177 = vpack.c.b16 %v121, %v117
  %v178 = vpack.c.b16 %v122, %v118
  %v179 = vpack.c.b16 %v123, %v119
  %v180 = vpack.c.b16 %v128, %v124
  %v181 = vpack.c.b16 %v129, %v125
  %v182 = vpack.c.b16 %v130, %v126
  %v183 = vpack.c.b16 %v131, %v127
  %v184 = vpack.c.b16 %v136, %v132
  %v185 = vpack.c.b16 %v137, %v133
  %v186 = vpack.c.b16 %v138, %v134
  %v187 = vpack.c.b16 %v139, %v135
  %v188 = vpack.c.b16 %v144, %v140
  %v189 = vpack.c.b16 %v145, %v141
  %v190 = vpack.c.b16 %v146, %v142
  %v191 = vpack.c.b16 %v147, %v143
  %v192 = vpack.c.b16 %v152, %v148
  %v193 = vpack.c.b16 %v153, %v149
  %v194 = vpack.c.b16 %v154, %v150
  %v195 = vpack.c.b16 %v155, %v151
  %v196 = vpack.c.b16 %v160, %v156
  %v197 = vpack.c.b16 %v161, %v157
  %v198 = vpack.c.b16 %v162, %v158
  %v199 = vpack.c.b16 %v163, %v159
  %v200 = vpack.c.b16 %v168, %v164
  %v201 = vpack.c.b16 %v169, %v165
  %v202 = vpack.c.b16 %v170, %v166
  %v203 = vpack.c.b16 %v171, %v167
  %236 = vmatpush.bf16.msra.mxu0 %v200
  %237 = vmatpush.bf16.msra.mxu0 %v196
  %238 = vmatpush.bf16.msra.mxu0 %v192
  %239 = vmatpush.bf16.msra.mxu0 %v188
  %240 = vmatpush.bf16.msra.mxu0 %v184
  %241 = vmatpush.bf16.msra.mxu0 %v180
  %242 = vmatpush.bf16.msra.mxu0 %v176
  %243 = vmatpush.bf16.msra.mxu0 %v172
  %244 = vmatmul.bf16.gmra.mxu0 %v69
  %v245 = vpop.f32.mrf.mxu0
  %v246 = vadd.f32 %v72, %v245
  %v247 = vpop.f32.mrf.mxu0
  %248 = vdwg.mxu0
  %249 = vmatpush.bf16.msra.mxu0 %v201
  %250 = vmatpush.bf16.msra.mxu0 %v197
  %251 = vmatpush.bf16.msra.mxu0 %v193
  %252 = vmatpush.bf16.msra.mxu0 %v189
  %253 = vmatpush.bf16.msra.mxu0 %v185
  %254 = vmatpush.bf16.msra.mxu0 %v181
  %255 = vmatpush.bf16.msra.mxu0 %v177
  %256 = vmatpush.bf16.msra.mxu0 %v173
  %257 = vmatmul.bf16.gmra.mxu0 %v69
  %v258 = vpop.f32.mrf.mxu0
  %v259 = vadd.f32 %v73, %v258
  %v260 = vpop.f32.mrf.mxu0
  %261 = vdwg.mxu0
  %262 = vmatpush.bf16.msra.mxu0 %v202
  %263 = vmatpush.bf16.msra.mxu0 %v198
  %264 = vmatpush.bf16.msra.mxu0 %v194
  %265 = vmatpush.bf16.msra.mxu0 %v190
  %266 = vmatpush.bf16.msra.mxu0 %v186
  %267 = vmatpush.bf16.msra.mxu0 %v182
  %268 = vmatpush.bf16.msra.mxu0 %v178
  %269 = vmatpush.bf16.msra.mxu0 %v174
  %270 = vmatmul.bf16.gmra.mxu0 %v69
  %v271 = vpop.f32.mrf.mxu0
  %v272 = vadd.f32 %v74, %v271
  %v273 = vpop.f32.mrf.mxu0
  %274 = vdwg.mxu0
  %275 = vmatpush.bf16.msra.mxu0 %v203
  %276 = vmatpush.bf16.msra.mxu0 %v199
  %277 = vmatpush.bf16.msra.mxu0 %v195
  %278 = vmatpush.bf16.msra.mxu0 %v191
  %279 = vmatpush.bf16.msra.mxu0 %v187
  %280 = vmatpush.bf16.msra.mxu0 %v183
  %281 = vmatpush.bf16.msra.mxu0 %v179
  %282 = vmatpush.bf16.msra.mxu0 %v175
  %283 = vmatmul.bf16.gmra.mxu0 %v69
  %v284 = vpop.f32.mrf.mxu0
  %v285 = vadd.f32 %v75, %v284
  %v286 = vpop.f32.mrf.mxu0
  %287 = vdwg.mxu0
  %v288 = vxor.u32 %v246, 2147483648
  %v289 = vmul.f32 %v288, 1.442695
  %v290 = vpow.pop %v289
  %v291 = vadd.f32 %v290, 1.0
  %v292 = vrcp.pop %v291
  %v293 = vmul.f32 %v291, %v292
  %v294 = vsub.f32 1.0, %v293
  %v295 = vmul.f32 %v292, %v294
  %v296 = vadd.f32 %v292, %v295
  %vm297 = vweird.f32 %v291
  %vm298 = vweird.f32 %v292
  %vm299 = vmor %vm297, %vm298
  %v300 = vsel %vm299, %v292, %v296
  %v301 = vand.u32 2147483647, %v291
  %vm302 = vcmp.eq.f32.partialorder %v301, 8.507059e+37
  %v303 = vand.u32 %v291, 2147483648
  %v304 = vor.u32 1.1754944e-38, %v303
  %v305 = vsel %vm302, %v304, %v300
  %v306 = vmul.f32 1.0, %v305
  %v307 = vxor.u32 %v259, 2147483648
  %v308 = vmul.f32 %v307, 1.442695
  %v309 = vpow.pop %v308
  %v310 = vadd.f32 %v309, 1.0
  %v311 = vrcp.pop %v310
  %v312 = vmul.f32 %v310, %v311
  %v313 = vsub.f32 1.0, %v312
  %v314 = vmul.f32 %v311, %v313
  %v315 = vadd.f32 %v311, %v314
  %vm316 = vweird.f32 %v310
  %vm317 = vweird.f32 %v311
  %vm318 = vmor %vm316, %vm317
  %v319 = vsel %vm318, %v311, %v315
  %v320 = vand.u32 2147483647, %v310
  %vm321 = vcmp.eq.f32.partialorder %v320, 8.507059e+37
  %v322 = vand.u32 %v310, 2147483648
  %v323 = vor.u32 1.1754944e-38, %v322
  %v324 = vsel %vm321, %v323, %v319
  %v325 = vmul.f32 1.0, %v324
  %v326 = vtanh.pop %v272
  %v327 = vxor.u32 %v285, 2147483648
  %v328 = vmul.f32 %v327, 1.442695
  %v329 = vpow.pop %v328
  %v330 = vadd.f32 %v329, 1.0
  %v331 = vrcp.pop %v330
  %v332 = vmul.f32 %v330, %v331
  %v333 = vsub.f32 1.0, %v332
  %v334 = vmul.f32 %v331, %v333
  %v335 = vadd.f32 %v331, %v334
  %vm336 = vweird.f32 %v330
  %vm337 = vweird.f32 %v331
  %vm338 = vmor %vm336, %vm337
  %v339 = vsel %vm338, %v331, %v335
  %v340 = vand.u32 2147483647, %v330
  %vm341 = vcmp.eq.f32.partialorder %v340, 8.507059e+37
  %v342 = vand.u32 %v330, 2147483648
  %v343 = vor.u32 1.1754944e-38, %v342
  %v344 = vsel %vm341, %v343, %v339
  %v345 = vmul.f32 1.0, %v344
  %v346 = vmul.f32 %v325, %v68
  %v347 = vmul.f32 %v306, %v326
  %v348 = vadd.f32 %v346, %v347
  %v349 = vtanh.pop %v348
  %v350 = vmul.f32 %v345, %v349
  %v351 = vpack.c.bf16 %v350, %v350
  %352 = vst [vmem:[%s4] sm:$0xf] %v351
  %s353 = scalar_lea.vmem %s1, 8
  %v354 = vld [vmem:[%s353] sm:$0xff]
  %356 = vset.pattern.permute.xlu0 0
  %357 = vperm.xlu0 %356, %v354
  %v358 = vpop.permute.xlu0 %357
  %v360 = vmul.f32 %v350, %v358
  %v361 = vmul.f32 %v348, %v358
  %v362 = vpack.c.bf16 %v360, %v360
  %s363 = scalar_lea.vmem %s0, 16
  %v364 = vld [vmem:[%s363] sm:$0xff]
  %v365 = vld [vmem:[%s363 + $0x8] sm:$0xff]
  %v366 = vunpack.c.l.bf16 %v364
  %v367 = vunpack.c.h.bf16 %v364
  %v368 = vunpack.c.l.bf16 %v365
  %v369 = vunpack.c.h.bf16 %v365
  %370 = vmatpush.bf16.msra.mxu0 %v200
  %371 = vmatpush.bf16.msra.mxu0 %v196
  %372 = vmatpush.bf16.msra.mxu0 %v192
  %373 = vmatpush.bf16.msra.mxu0 %v188
  %374 = vmatpush.bf16.msra.mxu0 %v184
  %375 = vmatpush.bf16.msra.mxu0 %v180
  %376 = vmatpush.bf16.msra.mxu0 %v176
  %377 = vmatpush.bf16.msra.mxu0 %v172
  %378 = vmatmul.bf16.gmra.mxu0 %v362
  %v379 = vpop.f32.mrf.mxu0
  %v380 = vadd.f32 %v366, %v379
  %v381 = vpop.f32.mrf.mxu0
  %382 = vdwg.mxu0
  %383 = vmatpush.bf16.msra.mxu0 %v201
  %384 = vmatpush.bf16.msra.mxu0 %v197
  %385 = vmatpush.bf16.msra.mxu0 %v193
  %386 = vmatpush.bf16.msra.mxu0 %v189
  %387 = vmatpush.bf16.msra.mxu0 %v185
  %388 = vmatpush.bf16.msra.mxu0 %v181
  %389 = vmatpush.bf16.msra.mxu0 %v177
  %390 = vmatpush.bf16.msra.mxu0 %v173
  %391 = vmatmul.bf16.gmra.mxu0 %v362
  %v392 = vpop.f32.mrf.mxu0
  %v393 = vadd.f32 %v367, %v392
  %v394 = vpop.f32.mrf.mxu0
  %395 = vdwg.mxu0
  %396 = vmatpush.bf16.msra.mxu0 %v202
  %397 = vmatpush.bf16.msra.mxu0 %v198
  %398 = vmatpush.bf16.msra.mxu0 %v194
  %399 = vmatpush.bf16.msra.mxu0 %v190
  %400 = vmatpush.bf16.msra.mxu0 %v186
  %401 = vmatpush.bf16.msra.mxu0 %v182
  %402 = vmatpush.bf16.msra.mxu0 %v178
  %403 = vmatpush.bf16.msra.mxu0 %v174
  %404 = vmatmul.bf16.gmra.mxu0 %v362
  %v405 = vpop.f32.mrf.mxu0
  %v406 = vadd.f32 %v368, %v405
  %v407 = vpop.f32.mrf.mxu0
  %408 = vdwg.mxu0
  %409 = vmatpush.bf16.msra.mxu0 %v203
  %410 = vmatpush.bf16.msra.mxu0 %v199
  %411 = vmatpush.bf16.msra.mxu0 %v195
  %412 = vmatpush.bf16.msra.mxu0 %v191
  %413 = vmatpush.bf16.msra.mxu0 %v187
  %414 = vmatpush.bf16.msra.mxu0 %v183
  %415 = vmatpush.bf16.msra.mxu0 %v179
  %416 = vmatpush.bf16.msra.mxu0 %v175
  %417 = vmatmul.bf16.gmra.mxu0 %v362
  %v418 = vpop.f32.mrf.mxu0
  %v419 = vadd.f32 %v369, %v418
  %v420 = vpop.f32.mrf.mxu0
  %421 = vdwg.mxu0
  %v422 = vxor.u32 %v380, 2147483648
  %v423 = vmul.f32 %v422, 1.442695
  %v424 = vpow.pop %v423
  %v425 = vadd.f32 %v424, 1.0
  %v426 = vrcp.pop %v425
  %v427 = vmul.f32 %v425, %v426
  %v428 = vsub.f32 1.0, %v427
  %v429 = vmul.f32 %v426, %v428
  %v430 = vadd.f32 %v426, %v429
  %vm431 = vweird.f32 %v425
  %vm432 = vweird.f32 %v426
  %vm433 = vmor %vm431, %vm432
  %v434 = vsel %vm433, %v426, %v430
  %v435 = vand.u32 2147483647, %v425
  %vm436 = vcmp.eq.f32.partialorder %v435, 8.507059e+37
  %v437 = vand.u32 %v425, 2147483648
  %v438 = vor.u32 1.1754944e-38, %v437
  %v439 = vsel %vm436, %v438, %v434
  %v440 = vmul.f32 1.0, %v439
  %v441 = vxor.u32 %v393, 2147483648
  %v442 = vmul.f32 %v441, 1.442695
  %v443 = vpow.pop %v442
  %v444 = vadd.f32 %v443, 1.0
  %v445 = vrcp.pop %v444
  %v446 = vmul.f32 %v444, %v445
  %v447 = vsub.f32 1.0, %v446
  %v448 = vmul.f32 %v445, %v447
  %v449 = vadd.f32 %v445, %v448
  %vm450 = vweird.f32 %v444
  %vm451 = vweird.f32 %v445
  %vm452 = vmor %vm450, %vm451
  %v453 = vsel %vm452, %v445, %v449
  %v454 = vand.u32 2147483647, %v444
  %vm455 = vcmp.eq.f32.partialorder %v454, 8.507059e+37
  %v456 = vand.u32 %v444, 2147483648
  %v457 = vor.u32 1.1754944e-38, %v456
  %v458 = vsel %vm455, %v457, %v453
  %v459 = vmul.f32 1.0, %v458
  %v460 = vtanh.pop %v406
  %v461 = vxor.u32 %v419, 2147483648
  %v462 = vmul.f32 %v461, 1.442695
  %v463 = vpow.pop %v462
  %v464 = vadd.f32 %v463, 1.0
  %v465 = vrcp.pop %v464
  %v466 = vmul.f32 %v464, %v465
  %v467 = vsub.f32 1.0, %v466
  %v468 = vmul.f32 %v465, %v467
  %v469 = vadd.f32 %v465, %v468
  %vm470 = vweird.f32 %v464
  %vm471 = vweird.f32 %v465
  %vm472 = vmor %vm470, %vm471
  %v473 = vsel %vm472, %v465, %v469
  %v474 = vand.u32 2147483647, %v464
  %vm475 = vcmp.eq.f32.partialorder %v474, 8.507059e+37
  %v476 = vand.u32 %v464, 2147483648
  %v477 = vor.u32 1.1754944e-38, %v476
  %v478 = vsel %vm475, %v477, %v473
  %v479 = vmul.f32 1.0, %v478
  %v480 = vmul.f32 %v459, %v361
  %v481 = vmul.f32 %v440, %v460
  %v482 = vadd.f32 %v480, %v481
  %v483 = vtanh.pop %v482
  %v484 = vmul.f32 %v479, %v483
  %v485 = vpack.c.bf16 %v484, %v484
  %s486 = scalar_lea.vmem %s4, 4
  %487 = vst [vmem:[%s486] sm:$0xf] %v485
  %s488 = scalar_lea.vmem %s1, 16
  %v489 = vld [vmem:[%s488] sm:$0xff]
  %491 = vset.pattern.permute.xlu0 0
  %492 = vperm.xlu0 %491, %v489
  %v493 = vpop.permute.xlu0 %492
  %v495 = vmul.f32 %v484, %v493
  %v496 = vmul.f32 %v482, %v493
  %v497 = vpack.c.bf16 %v495, %v495
  %s498 = scalar_lea.vmem %s0, 32
  %v499 = vld [vmem:[%s498] sm:$0xff]
  %v500 = vld [vmem:[%s498 + $0x8] sm:$0xff]
  %v501 = vunpack.c.l.bf16 %v499
  %v502 = vunpack.c.h.bf16 %v499
  %v503 = vunpack.c.l.bf16 %v500
  %v504 = vunpack.c.h.bf16 %v500
  %505 = vmatpush.bf16.msra.mxu0 %v200
  %506 = vmatpush.bf16.msra.mxu0 %v196
  %507 = vmatpush.bf16.msra.mxu0 %v192
  %508 = vmatpush.bf16.msra.mxu0 %v188
  %509 = vmatpush.bf16.msra.mxu0 %v184
  %510 = vmatpush.bf16.msra.mxu0 %v180
  %511 = vmatpush.bf16.msra.mxu0 %v176
  %512 = vmatpush.bf16.msra.mxu0 %v172
  %513 = vmatmul.bf16.gmra.mxu0 %v497
  %v514 = vpop.f32.mrf.mxu0
  %v515 = vadd.f32 %v501, %v514
  %v516 = vpop.f32.mrf.mxu0
  %517 = vdwg.mxu0
  %518 = vmatpush.bf16.msra.mxu0 %v201
  %519 = vmatpush.bf16.msra.mxu0 %v197
  %520 = vmatpush.bf16.msra.mxu0 %v193
  %521 = vmatpush.bf16.msra.mxu0 %v189
  %522 = vmatpush.bf16.msra.mxu0 %v185
  %523 = vmatpush.bf16.msra.mxu0 %v181
  %524 = vmatpush.bf16.msra.mxu0 %v177
  %525 = vmatpush.bf16.msra.mxu0 %v173
  %526 = vmatmul.bf16.gmra.mxu0 %v497
  %v527 = vpop.f32.mrf.mxu0
  %v528 = vadd.f32 %v502, %v527
  %v529 = vpop.f32.mrf.mxu0
  %530 = vdwg.mxu0
  %531 = vmatpush.bf16.msra.mxu0 %v202
  %532 = vmatpush.bf16.msra.mxu0 %v198
  %533 = vmatpush.bf16.msra.mxu0 %v194
  %534 = vmatpush.bf16.msra.mxu0 %v190
  %535 = vmatpush.bf16.msra.mxu0 %v186
  %536 = vmatpush.bf16.msra.mxu0 %v182
  %537 = vmatpush.bf16.msra.mxu0 %v178
  %538 = vmatpush.bf16.msra.mxu0 %v174
  %539 = vmatmul.bf16.gmra.mxu0 %v497
  %v540 = vpop.f32.mrf.mxu0
  %v541 = vadd.f32 %v503, %v540
  %v542 = vpop.f32.mrf.mxu0
  %543 = vdwg.mxu0
  %544 = vmatpush.bf16.msra.mxu0 %v203
  %545 = vmatpush.bf16.msra.mxu0 %v199
  %546 = vmatpush.bf16.msra.mxu0 %v195
  %547 = vmatpush.bf16.msra.mxu0 %v191
  %548 = vmatpush.bf16.msra.mxu0 %v187
  %549 = vmatpush.bf16.msra.mxu0 %v183
  %550 = vmatpush.bf16.msra.mxu0 %v179
  %551 = vmatpush.bf16.msra.mxu0 %v175
  %552 = vmatmul.bf16.gmra.mxu0 %v497
  %v553 = vpop.f32.mrf.mxu0
  %v554 = vadd.f32 %v504, %v553
  %v555 = vpop.f32.mrf.mxu0
  %556 = vdwg.mxu0
  %v557 = vxor.u32 %v515, 2147483648
  %v558 = vmul.f32 %v557, 1.442695
  %v559 = vpow.pop %v558
  %v560 = vadd.f32 %v559, 1.0
  %v561 = vrcp.pop %v560
  %v562 = vmul.f32 %v560, %v561
  %v563 = vsub.f32 1.0, %v562
  %v564 = vmul.f32 %v561, %v563
  %v565 = vadd.f32 %v561, %v564
  %vm566 = vweird.f32 %v560
  %vm567 = vweird.f32 %v561
  %vm568 = vmor %vm566, %vm567
  %v569 = vsel %vm568, %v561, %v565
  %v570 = vand.u32 2147483647, %v560
  %vm571 = vcmp.eq.f32.partialorder %v570, 8.507059e+37
  %v572 = vand.u32 %v560, 2147483648
  %v573 = vor.u32 1.1754944e-38, %v572
  %v574 = vsel %vm571, %v573, %v569
  %v575 = vmul.f32 1.0, %v574
  %v576 = vxor.u32 %v528, 2147483648
  %v577 = vmul.f32 %v576, 1.442695
  %v578 = vpow.pop %v577
  %v579 = vadd.f32 %v578, 1.0
  %v580 = vrcp.pop %v579
  %v581 = vmul.f32 %v579, %v580
  %v582 = vsub.f32 1.0, %v581
  %v583 = vmul.f32 %v580, %v582
  %v584 = vadd.f32 %v580, %v583
  %vm585 = vweird.f32 %v579
  %vm586 = vweird.f32 %v580
  %vm587 = vmor %vm585, %vm586
  %v588 = vsel %vm587, %v580, %v584
  %v589 = vand.u32 2147483647, %v579
  %vm590 = vcmp.eq.f32.partialorder %v589, 8.507059e+37
  %v591 = vand.u32 %v579, 2147483648
  %v592 = vor.u32 1.1754944e-38, %v591
  %v593 = vsel %vm590, %v592, %v588
  %v594 = vmul.f32 1.0, %v593
  %v595 = vtanh.pop %v541
  %v596 = vxor.u32 %v554, 2147483648
  %v597 = vmul.f32 %v596, 1.442695
  %v598 = vpow.pop %v597
  %v599 = vadd.f32 %v598, 1.0
  %v600 = vrcp.pop %v599
  %v601 = vmul.f32 %v599, %v600
  %v602 = vsub.f32 1.0, %v601
  %v603 = vmul.f32 %v600, %v602
  %v604 = vadd.f32 %v600, %v603
  %vm605 = vweird.f32 %v599
  %vm606 = vweird.f32 %v600
  %vm607 = vmor %vm605, %vm606
  %v608 = vsel %vm607, %v600, %v604
  %v609 = vand.u32 2147483647, %v599
  %vm610 = vcmp.eq.f32.partialorder %v609, 8.507059e+37
  %v611 = vand.u32 %v599, 2147483648
  %v612 = vor.u32 1.1754944e-38, %v611
  %v613 = vsel %vm610, %v612, %v608
  %v614 = vmul.f32 1.0, %v613
  %v615 = vmul.f32 %v594, %v496
  %v616 = vmul.f32 %v575, %v595
  %v617 = vadd.f32 %v615, %v616
  %v618 = vtanh.pop %v617
  %v619 = vmul.f32 %v614, %v618
  %v620 = vpack.c.bf16 %v619, %v619
  %s621 = scalar_lea.vmem %s4, 8
  %622 = vst [vmem:[%s621] sm:$0xf] %v620
  %s623 = scalar_lea.vmem %s1, 24
  %v624 = vld [vmem:[%s623] sm:$0xff]
  %626 = vset.pattern.permute.xlu0 0
  %627 = vperm.xlu0 %626, %v624
  %v628 = vpop.permute.xlu0 %627
  %v630 = vmul.f32 %v619, %v628
  %v631 = vmul.f32 %v617, %v628
  %v632 = vpack.c.bf16 %v630, %v630
  %s633 = scalar_lea.vmem %s0, 48
  %v634 = vld [vmem:[%s633] sm:$0xff]
  %v635 = vld [vmem:[%s633 + $0x8] sm:$0xff]
  %v636 = vunpack.c.l.bf16 %v634
  %v637 = vunpack.c.h.bf16 %v634
  %v638 = vunpack.c.l.bf16 %v635
  %v639 = vunpack.c.h.bf16 %v635
  %640 = vmatpush.bf16.msra.mxu0 %v200
  %641 = vmatpush.bf16.msra.mxu0 %v196
  %642 = vmatpush.bf16.msra.mxu0 %v192
  %643 = vmatpush.bf16.msra.mxu0 %v188
  %644 = vmatpush.bf16.msra.mxu0 %v184
  %645 = vmatpush.bf16.msra.mxu0 %v180
  %646 = vmatpush.bf16.msra.mxu0 %v176
  %647 = vmatpush.bf16.msra.mxu0 %v172
  %648 = vmatmul.bf16.gmra.mxu0 %v632
  %v649 = vpop.f32.mrf.mxu0
  %v650 = vadd.f32 %v636, %v649
  %v651 = vpop.f32.mrf.mxu0
  %652 = vdwg.mxu0
  %653 = vmatpush.bf16.msra.mxu0 %v201
  %654 = vmatpush.bf16.msra.mxu0 %v197
  %655 = vmatpush.bf16.msra.mxu0 %v193
  %656 = vmatpush.bf16.msra.mxu0 %v189
  %657 = vmatpush.bf16.msra.mxu0 %v185
  %658 = vmatpush.bf16.msra.mxu0 %v181
  %659 = vmatpush.bf16.msra.mxu0 %v177
  %660 = vmatpush.bf16.msra.mxu0 %v173
  %661 = vmatmul.bf16.gmra.mxu0 %v632
  %v662 = vpop.f32.mrf.mxu0
  %v663 = vadd.f32 %v637, %v662
  %v664 = vpop.f32.mrf.mxu0
  %665 = vdwg.mxu0
  %666 = vmatpush.bf16.msra.mxu0 %v202
  %667 = vmatpush.bf16.msra.mxu0 %v198
  %668 = vmatpush.bf16.msra.mxu0 %v194
  %669 = vmatpush.bf16.msra.mxu0 %v190
  %670 = vmatpush.bf16.msra.mxu0 %v186
  %671 = vmatpush.bf16.msra.mxu0 %v182
  %672 = vmatpush.bf16.msra.mxu0 %v178
  %673 = vmatpush.bf16.msra.mxu0 %v174
  %674 = vmatmul.bf16.gmra.mxu0 %v632
  %v675 = vpop.f32.mrf.mxu0
  %v676 = vadd.f32 %v638, %v675
  %v677 = vpop.f32.mrf.mxu0
  %678 = vdwg.mxu0
  %679 = vmatpush.bf16.msra.mxu0 %v203
  %680 = vmatpush.bf16.msra.mxu0 %v199
  %681 = vmatpush.bf16.msra.mxu0 %v195
  %682 = vmatpush.bf16.msra.mxu0 %v191
  %683 = vmatpush.bf16.msra.mxu0 %v187
  %684 = vmatpush.bf16.msra.mxu0 %v183
  %685 = vmatpush.bf16.msra.mxu0 %v179
  %686 = vmatpush.bf16.msra.mxu0 %v175
  %687 = vmatmul.bf16.gmra.mxu0 %v632
  %v688 = vpop.f32.mrf.mxu0
  %v689 = vadd.f32 %v639, %v688
  %v690 = vpop.f32.mrf.mxu0
  %691 = vdwg.mxu0
  %v692 = vxor.u32 %v650, 2147483648
  %v693 = vmul.f32 %v692, 1.442695
  %v694 = vpow.pop %v693
  %v695 = vadd.f32 %v694, 1.0
  %v696 = vrcp.pop %v695
  %v697 = vmul.f32 %v695, %v696
  %v698 = vsub.f32 1.0, %v697
  %v699 = vmul.f32 %v696, %v698
  %v700 = vadd.f32 %v696, %v699
  %vm701 = vweird.f32 %v695
  %vm702 = vweird.f32 %v696
  %vm703 = vmor %vm701, %vm702
  %v704 = vsel %vm703, %v696, %v700
  %v705 = vand.u32 2147483647, %v695
  %vm706 = vcmp.eq.f32.partialorder %v705, 8.507059e+37
  %v707 = vand.u32 %v695, 2147483648
  %v708 = vor.u32 1.1754944e-38, %v707
  %v709 = vsel %vm706, %v708, %v704
  %v710 = vmul.f32 1.0, %v709
  %v711 = vxor.u32 %v663, 2147483648
  %v712 = vmul.f32 %v711, 1.442695
  %v713 = vpow.pop %v712
  %v714 = vadd.f32 %v713, 1.0
  %v715 = vrcp.pop %v714
  %v716 = vmul.f32 %v714, %v715
  %v717 = vsub.f32 1.0, %v716
  %v718 = vmul.f32 %v715, %v717
  %v719 = vadd.f32 %v715, %v718
  %vm720 = vweird.f32 %v714
  %vm721 = vweird.f32 %v715
  %vm722 = vmor %vm720, %vm721
  %v723 = vsel %vm722, %v715, %v719
  %v724 = vand.u32 2147483647, %v714
  %vm725 = vcmp.eq.f32.partialorder %v724, 8.507059e+37
  %v726 = vand.u32 %v714, 2147483648
  %v727 = vor.u32 1.1754944e-38, %v726
  %v728 = vsel %vm725, %v727, %v723
  %v729 = vmul.f32 1.0, %v728
  %v730 = vtanh.pop %v676
  %v731 = vxor.u32 %v689, 2147483648
  %v732 = vmul.f32 %v731, 1.442695
  %v733 = vpow.pop %v732
  %v734 = vadd.f32 %v733, 1.0
  %v735 = vrcp.pop %v734
  %v736 = vmul.f32 %v734, %v735
  %v737 = vsub.f32 1.0, %v736
  %v738 = vmul.f32 %v735, %v737
  %v739 = vadd.f32 %v735, %v738
  %vm740 = vweird.f32 %v734
  %vm741 = vweird.f32 %v735
  %vm742 = vmor %vm740, %vm741
  %v743 = vsel %vm742, %v735, %v739
  %v744 = vand.u32 2147483647, %v734
  %vm745 = vcmp.eq.f32.partialorder %v744, 8.507059e+37
  %v746 = vand.u32 %v734, 2147483648
  %v747 = vor.u32 1.1754944e-38, %v746
  %v748 = vsel %vm745, %v747, %v743
  %v749 = vmul.f32 1.0, %v748
  %v750 = vmul.f32 %v729, %v631
  %v751 = vmul.f32 %v710, %v730
  %v752 = vadd.f32 %v750, %v751
  %v753 = vtanh.pop %v752
  %v754 = vmul.f32 %v749, %v753
  %v755 = vpack.c.bf16 %v754, %v754
  %s756 = scalar_lea.vmem %s4, 12
  %757 = vst [vmem:[%s756] sm:$0xf] %v755
  %s758 = scalar_lea.vmem %s1, 32
  %v759 = vld [vmem:[%s758] sm:$0xff]
  %761 = vset.pattern.permute.xlu0 0
  %762 = vperm.xlu0 %761, %v759
  %v763 = vpop.permute.xlu0 %762
  %v765 = vmul.f32 %v754, %v763
  %v766 = vmul.f32 %v752, %v763
  %v767 = vpack.c.bf16 %v765, %v765
  %s768 = scalar_lea.vmem %s0, 64
  %v769 = vld [vmem:[%s768] sm:$0xff]
  %v770 = vld [vmem:[%s768 + $0x8] sm:$0xff]
  %v771 = vunpack.c.l.bf16 %v769
  %v772 = vunpack.c.h.bf16 %v769
  %v773 = vunpack.c.l.bf16 %v770
  %v774 = vunpack.c.h.bf16 %v770
  %775 = vmatpush.bf16.msra.mxu0 %v200
  %776 = vmatpush.bf16.msra.mxu0 %v196
  %777 = vmatpush.bf16.msra.mxu0 %v192
  %778 = vmatpush.bf16.msra.mxu0 %v188
  %779 = vmatpush.bf16.msra.mxu0 %v184
  %780 = vmatpush.bf16.msra.mxu0 %v180
  %781 = vmatpush.bf16.msra.mxu0 %v176
  %782 = vmatpush.bf16.msra.mxu0 %v172
  %783 = vmatmul.bf16.gmra.mxu0 %v767
  %v784 = vpop.f32.mrf.mxu0
  %v785 = vadd.f32 %v771, %v784
  %v786 = vpop.f32.mrf.mxu0
  %787 = vdwg.mxu0
  %788 = vmatpush.bf16.msra.mxu0 %v201
  %789 = vmatpush.bf16.msra.mxu0 %v197
  %790 = vmatpush.bf16.msra.mxu0 %v193
  %791 = vmatpush.bf16.msra.mxu0 %v189
  %792 = vmatpush.bf16.msra.mxu0 %v185
  %793 = vmatpush.bf16.msra.mxu0 %v181
  %794 = vmatpush.bf16.msra.mxu0 %v177
  %795 = vmatpush.bf16.msra.mxu0 %v173
  %796 = vmatmul.bf16.gmra.mxu0 %v767
  %v797 = vpop.f32.mrf.mxu0
  %v798 = vadd.f32 %v772, %v797
  %v799 = vpop.f32.mrf.mxu0
  %800 = vdwg.mxu0
  %801 = vmatpush.bf16.msra.mxu0 %v202
  %802 = vmatpush.bf16.msra.mxu0 %v198
  %803 = vmatpush.bf16.msra.mxu0 %v194
  %804 = vmatpush.bf16.msra.mxu0 %v190
  %805 = vmatpush.bf16.msra.mxu0 %v186
  %806 = vmatpush.bf16.msra.mxu0 %v182
  %807 = vmatpush.bf16.msra.mxu0 %v178
  %808 = vmatpush.bf16.msra.mxu0 %v174
  %809 = vmatmul.bf16.gmra.mxu0 %v767
  %v810 = vpop.f32.mrf.mxu0
  %v811 = vadd.f32 %v773, %v810
  %v812 = vpop.f32.mrf.mxu0
  %813 = vdwg.mxu0
  %814 = vmatpush.bf16.msra.mxu0 %v203
  %815 = vmatpush.bf16.msra.mxu0 %v199
  %816 = vmatpush.bf16.msra.mxu0 %v195
  %817 = vmatpush.bf16.msra.mxu0 %v191
  %818 = vmatpush.bf16.msra.mxu0 %v187
  %819 = vmatpush.bf16.msra.mxu0 %v183
  %820 = vmatpush.bf16.msra.mxu0 %v179
  %821 = vmatpush.bf16.msra.mxu0 %v175
  %822 = vmatmul.bf16.gmra.mxu0 %v767
  %v823 = vpop.f32.mrf.mxu0
  %v824 = vadd.f32 %v774, %v823
  %v825 = vpop.f32.mrf.mxu0
  %826 = vdwg.mxu0
  %v827 = vxor.u32 %v785, 2147483648
  %v828 = vmul.f32 %v827, 1.442695
  %v829 = vpow.pop %v828
  %v830 = vadd.f32 %v829, 1.0
  %v831 = vrcp.pop %v830
  %v832 = vmul.f32 %v830, %v831
  %v833 = vsub.f32 1.0, %v832
  %v834 = vmul.f32 %v831, %v833
  %v835 = vadd.f32 %v831, %v834
  %vm836 = vweird.f32 %v830
  %vm837 = vweird.f32 %v831
  %vm838 = vmor %vm836, %vm837
  %v839 = vsel %vm838, %v831, %v835
  %v840 = vand.u32 2147483647, %v830
  %vm841 = vcmp.eq.f32.partialorder %v840, 8.507059e+37
  %v842 = vand.u32 %v830, 2147483648
  %v843 = vor.u32 1.1754944e-38, %v842
  %v844 = vsel %vm841, %v843, %v839
  %v845 = vmul.f32 1.0, %v844
  %v846 = vxor.u32 %v798, 2147483648
  %v847 = vmul.f32 %v846, 1.442695
  %v848 = vpow.pop %v847
  %v849 = vadd.f32 %v848, 1.0
  %v850 = vrcp.pop %v849
  %v851 = vmul.f32 %v849, %v850
  %v852 = vsub.f32 1.0, %v851
  %v853 = vmul.f32 %v850, %v852
  %v854 = vadd.f32 %v850, %v853
  %vm855 = vweird.f32 %v849
  %vm856 = vweird.f32 %v850
  %vm857 = vmor %vm855, %vm856
  %v858 = vsel %vm857, %v850, %v854
  %v859 = vand.u32 2147483647, %v849
  %vm860 = vcmp.eq.f32.partialorder %v859, 8.507059e+37
  %v861 = vand.u32 %v849, 2147483648
  %v862 = vor.u32 1.1754944e-38, %v861
  %v863 = vsel %vm860, %v862, %v858
  %v864 = vmul.f32 1.0, %v863
  %v865 = vtanh.pop %v811
  %v866 = vxor.u32 %v824, 2147483648
  %v867 = vmul.f32 %v866, 1.442695
  %v868 = vpow.pop %v867
  %v869 = vadd.f32 %v868, 1.0
  %v870 = vrcp.pop %v869
  %v871 = vmul.f32 %v869, %v870
  %v872 = vsub.f32 1.0, %v871
  %v873 = vmul.f32 %v870, %v872
  %v874 = vadd.f32 %v870, %v873
  %vm875 = vweird.f32 %v869
  %vm876 = vweird.f32 %v870
  %vm877 = vmor %vm875, %vm876
  %v878 = vsel %vm877, %v870, %v874
  %v879 = vand.u32 2147483647, %v869
  %vm880 = vcmp.eq.f32.partialorder %v879, 8.507059e+37
  %v881 = vand.u32 %v869, 2147483648
  %v882 = vor.u32 1.1754944e-38, %v881
  %v883 = vsel %vm880, %v882, %v878
  %v884 = vmul.f32 1.0, %v883
  %v885 = vmul.f32 %v864, %v766
  %v886 = vmul.f32 %v845, %v865
  %v887 = vadd.f32 %v885, %v886
  %v888 = vtanh.pop %v887
  %v889 = vmul.f32 %v884, %v888
  %v890 = vpack.c.bf16 %v889, %v889
  %s891 = scalar_lea.vmem %s4, 16
  %892 = vst [vmem:[%s891] sm:$0xf] %v890
  %s893 = scalar_lea.vmem %s1, 40
  %v894 = vld [vmem:[%s893] sm:$0xff]
  %896 = vset.pattern.permute.xlu0 0
  %897 = vperm.xlu0 %896, %v894
  %v898 = vpop.permute.xlu0 %897
  %v900 = vmul.f32 %v889, %v898
  %v901 = vmul.f32 %v887, %v898
  %v902 = vpack.c.bf16 %v900, %v900
  %s903 = scalar_lea.vmem %s0, 80
  %v904 = vld [vmem:[%s903] sm:$0xff]
  %v905 = vld [vmem:[%s903 + $0x8] sm:$0xff]
  %v906 = vunpack.c.l.bf16 %v904
  %v907 = vunpack.c.h.bf16 %v904
  %v908 = vunpack.c.l.bf16 %v905
  %v909 = vunpack.c.h.bf16 %v905
  %910 = vmatpush.bf16.msra.mxu0 %v200
  %911 = vmatpush.bf16.msra.mxu0 %v196
  %912 = vmatpush.bf16.msra.mxu0 %v192
  %913 = vmatpush.bf16.msra.mxu0 %v188
  %914 = vmatpush.bf16.msra.mxu0 %v184
  %915 = vmatpush.bf16.msra.mxu0 %v180
  %916 = vmatpush.bf16.msra.mxu0 %v176
  %917 = vmatpush.bf16.msra.mxu0 %v172
  %918 = vmatmul.bf16.gmra.mxu0 %v902
  %v919 = vpop.f32.mrf.mxu0
  %v920 = vadd.f32 %v906, %v919
  %v921 = vpop.f32.mrf.mxu0
  %922 = vdwg.mxu0
  %923 = vmatpush.bf16.msra.mxu0 %v201
  %924 = vmatpush.bf16.msra.mxu0 %v197
  %925 = vmatpush.bf16.msra.mxu0 %v193
  %926 = vmatpush.bf16.msra.mxu0 %v189
  %927 = vmatpush.bf16.msra.mxu0 %v185
  %928 = vmatpush.bf16.msra.mxu0 %v181
  %929 = vmatpush.bf16.msra.mxu0 %v177
  %930 = vmatpush.bf16.msra.mxu0 %v173
  %931 = vmatmul.bf16.gmra.mxu0 %v902
  %v932 = vpop.f32.mrf.mxu0
  %v933 = vadd.f32 %v907, %v932
  %v934 = vpop.f32.mrf.mxu0
  %935 = vdwg.mxu0
  %936 = vmatpush.bf16.msra.mxu0 %v202
  %937 = vmatpush.bf16.msra.mxu0 %v198
  %938 = vmatpush.bf16.msra.mxu0 %v194
  %939 = vmatpush.bf16.msra.mxu0 %v190
  %940 = vmatpush.bf16.msra.mxu0 %v186
  %941 = vmatpush.bf16.msra.mxu0 %v182
  %942 = vmatpush.bf16.msra.mxu0 %v178
  %943 = vmatpush.bf16.msra.mxu0 %v174
  %944 = vmatmul.bf16.gmra.mxu0 %v902
  %v945 = vpop.f32.mrf.mxu0
  %v946 = vadd.f32 %v908, %v945
  %v947 = vpop.f32.mrf.mxu0
  %948 = vdwg.mxu0
  %949 = vmatpush.bf16.msra.mxu0 %v203
  %950 = vmatpush.bf16.msra.mxu0 %v199
  %951 = vmatpush.bf16.msra.mxu0 %v195
  %952 = vmatpush.bf16.msra.mxu0 %v191
  %953 = vmatpush.bf16.msra.mxu0 %v187
  %954 = vmatpush.bf16.msra.mxu0 %v183
  %955 = vmatpush.bf16.msra.mxu0 %v179
  %956 = vmatpush.bf16.msra.mxu0 %v175
  %957 = vmatmul.bf16.gmra.mxu0 %v902
  %v958 = vpop.f32.mrf.mxu0
  %v959 = vadd.f32 %v909, %v958
  %v960 = vpop.f32.mrf.mxu0
  %961 = vdwg.mxu0
  %v962 = vxor.u32 %v920, 2147483648
  %v963 = vmul.f32 %v962, 1.442695
  %v964 = vpow.pop %v963
  %v965 = vadd.f32 %v964, 1.0
  %v966 = vrcp.pop %v965
  %v967 = vmul.f32 %v965, %v966
  %v968 = vsub.f32 1.0, %v967
  %v969 = vmul.f32 %v966, %v968
  %v970 = vadd.f32 %v966, %v969
  %vm971 = vweird.f32 %v965
  %vm972 = vweird.f32 %v966
  %vm973 = vmor %vm971, %vm972
  %v974 = vsel %vm973, %v966, %v970
  %v975 = vand.u32 2147483647, %v965
  %vm976 = vcmp.eq.f32.partialorder %v975, 8.507059e+37
  %v977 = vand.u32 %v965, 2147483648
  %v978 = vor.u32 1.1754944e-38, %v977
  %v979 = vsel %vm976, %v978, %v974
  %v980 = vmul.f32 1.0, %v979
  %v981 = vxor.u32 %v933, 2147483648
  %v982 = vmul.f32 %v981, 1.442695
  %v983 = vpow.pop %v982
  %v984 = vadd.f32 %v983, 1.0
  %v985 = vrcp.pop %v984
  %v986 = vmul.f32 %v984, %v985
  %v987 = vsub.f32 1.0, %v986
  %v988 = vmul.f32 %v985, %v987
  %v989 = vadd.f32 %v985, %v988
  %vm990 = vweird.f32 %v984
  %vm991 = vweird.f32 %v985
  %vm992 = vmor %vm990, %vm991
  %v993 = vsel %vm992, %v985, %v989
  %v994 = vand.u32 2147483647, %v984
  %vm995 = vcmp.eq.f32.partialorder %v994, 8.507059e+37
  %v996 = vand.u32 %v984, 2147483648
  %v997 = vor.u32 1.1754944e-38, %v996
  %v998 = vsel %vm995, %v997, %v993
  %v999 = vmul.f32 1.0, %v998
  %v1000 = vtanh.pop %v946
  %v1001 = vxor.u32 %v959, 2147483648
  %v1002 = vmul.f32 %v1001, 1.442695
  %v1003 = vpow.pop %v1002
  %v1004 = vadd.f32 %v1003, 1.0
  %v1005 = vrcp.pop %v1004
  %v1006 = vmul.f32 %v1004, %v1005
  %v1007 = vsub.f32 1.0, %v1006
  %v1008 = vmul.f32 %v1005, %v1007
  %v1009 = vadd.f32 %v1005, %v1008
  %vm1010 = vweird.f32 %v1004
  %vm1011 = vweird.f32 %v1005
  %vm1012 = vmor %vm1010, %vm1011
  %v1013 = vsel %vm1012, %v1005, %v1009
  %v1014 = vand.u32 2147483647, %v1004
  %vm1015 = vcmp.eq.f32.partialorder %v1014, 8.507059e+37
  %v1016 = vand.u32 %v1004, 2147483648
  %v1017 = vor.u32 1.1754944e-38, %v1016
  %v1018 = vsel %vm1015, %v1017, %v1013
  %v1019 = vmul.f32 1.0, %v1018
  %v1020 = vmul.f32 %v999, %v901
  %v1021 = vmul.f32 %v980, %v1000
  %v1022 = vadd.f32 %v1020, %v1021
  %v1023 = vtanh.pop %v1022
  %v1024 = vmul.f32 %v1019, %v1023
  %v1025 = vpack.c.bf16 %v1024, %v1024
  %s1026 = scalar_lea.vmem %s4, 20
  %1027 = vst [vmem:[%s1026] sm:$0xf] %v1025
  %s1028 = scalar_lea.vmem %s1, 48
  %v1029 = vld [vmem:[%s1028] sm:$0xff]
  %1031 = vset.pattern.permute.xlu0 0
  %1032 = vperm.xlu0 %1031, %v1029
  %v1033 = vpop.permute.xlu0 %1032
  %v1035 = vmul.f32 %v1024, %v1033
  %v1036 = vmul.f32 %v1022, %v1033
  %v1037 = vpack.c.bf16 %v1035, %v1035
  %s1038 = scalar_lea.vmem %s0, 96
  %v1039 = vld [vmem:[%s1038] sm:$0xff]
  %v1040 = vld [vmem:[%s1038 + $0x8] sm:$0xff]
  %v1041 = vunpack.c.l.bf16 %v1039
  %v1042 = vunpack.c.h.bf16 %v1039
  %v1043 = vunpack.c.l.bf16 %v1040
  %v1044 = vunpack.c.h.bf16 %v1040
  %1045 = vmatpush.bf16.msra.mxu0 %v200
  %1046 = vmatpush.bf16.msra.mxu0 %v196
  %1047 = vmatpush.bf16.msra.mxu0 %v192
  %1048 = vmatpush.bf16.msra.mxu0 %v188
  %1049 = vmatpush.bf16.msra.mxu0 %v184
  %1050 = vmatpush.bf16.msra.mxu0 %v180
  %1051 = vmatpush.bf16.msra.mxu0 %v176
  %1052 = vmatpush.bf16.msra.mxu0 %v172
  %1053 = vmatmul.bf16.gmra.mxu0 %v1037
  %v1054 = vpop.f32.mrf.mxu0
  %v1055 = vadd.f32 %v1041, %v1054
  %v1056 = vpop.f32.mrf.mxu0
  %1057 = vdwg.mxu0
  %1058 = vmatpush.bf16.msra.mxu0 %v201
  %1059 = vmatpush.bf16.msra.mxu0 %v197
  %1060 = vmatpush.bf16.msra.mxu0 %v193
  %1061 = vmatpush.bf16.msra.mxu0 %v189
  %1062 = vmatpush.bf16.msra.mxu0 %v185
  %1063 = vmatpush.bf16.msra.mxu0 %v181
  %1064 = vmatpush.bf16.msra.mxu0 %v177
  %1065 = vmatpush.bf16.msra.mxu0 %v173
  %1066 = vmatmul.bf16.gmra.mxu0 %v1037
  %v1067 = vpop.f32.mrf.mxu0
  %v1068 = vadd.f32 %v1042, %v1067
  %v1069 = vpop.f32.mrf.mxu0
  %1070 = vdwg.mxu0
  %1071 = vmatpush.bf16.msra.mxu0 %v202
  %1072 = vmatpush.bf16.msra.mxu0 %v198
  %1073 = vmatpush.bf16.msra.mxu0 %v194
  %1074 = vmatpush.bf16.msra.mxu0 %v190
  %1075 = vmatpush.bf16.msra.mxu0 %v186
  %1076 = vmatpush.bf16.msra.mxu0 %v182
  %1077 = vmatpush.bf16.msra.mxu0 %v178
  %1078 = vmatpush.bf16.msra.mxu0 %v174
  %1079 = vmatmul.bf16.gmra.mxu0 %v1037
  %v1080 = vpop.f32.mrf.mxu0
  %v1081 = vadd.f32 %v1043, %v1080
  %v1082 = vpop.f32.mrf.mxu0
  %1083 = vdwg.mxu0
  %1084 = vmatpush.bf16.msra.mxu0 %v203
  %1085 = vmatpush.bf16.msra.mxu0 %v199
  %1086 = vmatpush.bf16.msra.mxu0 %v195
  %1087 = vmatpush.bf16.msra.mxu0 %v191
  %1088 = vmatpush.bf16.msra.mxu0 %v187
  %1089 = vmatpush.bf16.msra.mxu0 %v183
  %1090 = vmatpush.bf16.msra.mxu0 %v179
  %1091 = vmatpush.bf16.msra.mxu0 %v175
  %1092 = vmatmul.bf16.gmra.mxu0 %v1037
  %v1093 = vpop.f32.mrf.mxu0
  %v1094 = vadd.f32 %v1044, %v1093
  %v1095 = vpop.f32.mrf.mxu0
  %1096 = vdwg.mxu0
  %v1097 = vxor.u32 %v1055, 2147483648
  %v1098 = vmul.f32 %v1097, 1.442695
  %v1099 = vpow.pop %v1098
  %v1100 = vadd.f32 %v1099, 1.0
  %v1101 = vrcp.pop %v1100
  %v1102 = vmul.f32 %v1100, %v1101
  %v1103 = vsub.f32 1.0, %v1102
  %v1104 = vmul.f32 %v1101, %v1103
  %v1105 = vadd.f32 %v1101, %v1104
  %vm1106 = vweird.f32 %v1100
  %vm1107 = vweird.f32 %v1101
  %vm1108 = vmor %vm1106, %vm1107
  %v1109 = vsel %vm1108, %v1101, %v1105
  %v1110 = vand.u32 2147483647, %v1100
  %vm1111 = vcmp.eq.f32.partialorder %v1110, 8.507059e+37
  %v1112 = vand.u32 %v1100, 2147483648
  %v1113 = vor.u32 1.1754944e-38, %v1112
  %v1114 = vsel %vm1111, %v1113, %v1109
  %v1115 = vmul.f32 1.0, %v1114
  %v1116 = vxor.u32 %v1068, 2147483648
  %v1117 = vmul.f32 %v1116, 1.442695
  %v1118 = vpow.pop %v1117
  %v1119 = vadd.f32 %v1118, 1.0
  %v1120 = vrcp.pop %v1119
  %v1121 = vmul.f32 %v1119, %v1120
  %v1122 = vsub.f32 1.0, %v1121
  %v1123 = vmul.f32 %v1120, %v1122
  %v1124 = vadd.f32 %v1120, %v1123
  %vm1125 = vweird.f32 %v1119
  %vm1126 = vweird.f32 %v1120
  %vm1127 = vmor %vm1125, %vm1126
  %v1128 = vsel %vm1127, %v1120, %v1124
  %v1129 = vand.u32 2147483647, %v1119
  %vm1130 = vcmp.eq.f32.partialorder %v1129, 8.507059e+37
  %v1131 = vand.u32 %v1119, 2147483648
  %v1132 = vor.u32 1.1754944e-38, %v1131
  %v1133 = vsel %vm1130, %v1132, %v1128
  %v1134 = vmul.f32 1.0, %v1133
  %v1135 = vtanh.pop %v1081
  %v1136 = vxor.u32 %v1094, 2147483648
  %v1137 = vmul.f32 %v1136, 1.442695
  %v1138 = vpow.pop %v1137
  %v1139 = vadd.f32 %v1138, 1.0
  %v1140 = vrcp.pop %v1139
  %v1141 = vmul.f32 %v1139, %v1140
  %v1142 = vsub.f32 1.0, %v1141
  %v1143 = vmul.f32 %v1140, %v1142
  %v1144 = vadd.f32 %v1140, %v1143
  %vm1145 = vweird.f32 %v1139
  %vm1146 = vweird.f32 %v1140
  %vm1147 = vmor %vm1145, %vm1146
  %v1148 = vsel %vm1147, %v1140, %v1144
  %v1149 = vand.u32 2147483647, %v1139
  %vm1150 = vcmp.eq.f32.partialorder %v1149, 8.507059e+37
  %v1151 = vand.u32 %v1139, 2147483648
  %v1152 = vor.u32 1.1754944e-38, %v1151
  %v1153 = vsel %vm1150, %v1152, %v1148
  %v1154 = vmul.f32 1.0, %v1153
  %v1155 = vmul.f32 %v1134, %v1036
  %v1156 = vmul.f32 %v1115, %v1135
  %v1157 = vadd.f32 %v1155, %v1156
  %v1158 = vtanh.pop %v1157
  %v1159 = vmul.f32 %v1154, %v1158
  %v1160 = vpack.c.bf16 %v1159, %v1159
  %s1161 = scalar_lea.vmem %s4, 24
  %1162 = vst [vmem:[%s1161] sm:$0xf] %v1160
  %s1163 = scalar_lea.vmem %s1, 56
  %v1164 = vld [vmem:[%s1163] sm:$0xff]
  %1166 = vset.pattern.permute.xlu0 0
  %1167 = vperm.xlu0 %1166, %v1164
  %v1168 = vpop.permute.xlu0 %1167
  %v1170 = vmul.f32 %v1159, %v1168
  %v1171 = vmul.f32 %v1157, %v1168
  %v1172 = vpack.c.bf16 %v1170, %v1170
  %s1173 = scalar_lea.vmem %s0, 112
  %v1174 = vld [vmem:[%s1173] sm:$0xff]
  %v1175 = vld [vmem:[%s1173 + $0x8] sm:$0xff]
  %v1176 = vunpack.c.l.bf16 %v1174
  %v1177 = vunpack.c.h.bf16 %v1174
  %v1178 = vunpack.c.l.bf16 %v1175
  %v1179 = vunpack.c.h.bf16 %v1175
  %1180 = vmatpush.bf16.msra.mxu0 %v200
  %1181 = vmatpush.bf16.msra.mxu0 %v196
  %1182 = vmatpush.bf16.msra.mxu0 %v192
  %1183 = vmatpush.bf16.msra.mxu0 %v188
  %1184 = vmatpush.bf16.msra.mxu0 %v184
  %1185 = vmatpush.bf16.msra.mxu0 %v180
  %1186 = vmatpush.bf16.msra.mxu0 %v176
  %1187 = vmatpush.bf16.msra.mxu0 %v172
  %1188 = vmatmul.bf16.gmra.mxu0 %v1172
  %v1189 = vpop.f32.mrf.mxu0
  %v1190 = vadd.f32 %v1176, %v1189
  %v1191 = vpop.f32.mrf.mxu0
  %1192 = vdwg.mxu0
  %1193 = vmatpush.bf16.msra.mxu0 %v201
  %1194 = vmatpush.bf16.msra.mxu0 %v197
  %1195 = vmatpush.bf16.msra.mxu0 %v193
  %1196 = vmatpush.bf16.msra.mxu0 %v189
  %1197 = vmatpush.bf16.msra.mxu0 %v185
  %1198 = vmatpush.bf16.msra.mxu0 %v181
  %1199 = vmatpush.bf16.msra.mxu0 %v177
  %1200 = vmatpush.bf16.msra.mxu0 %v173
  %1201 = vmatmul.bf16.gmra.mxu0 %v1172
  %v1202 = vpop.f32.mrf.mxu0
  %v1203 = vadd.f32 %v1177, %v1202
  %v1204 = vpop.f32.mrf.mxu0
  %1205 = vdwg.mxu0
  %1206 = vmatpush.bf16.msra.mxu0 %v202
  %1207 = vmatpush.bf16.msra.mxu0 %v198
  %1208 = vmatpush.bf16.msra.mxu0 %v194
  %1209 = vmatpush.bf16.msra.mxu0 %v190
  %1210 = vmatpush.bf16.msra.mxu0 %v186
  %1211 = vmatpush.bf16.msra.mxu0 %v182
  %1212 = vmatpush.bf16.msra.mxu0 %v178
  %1213 = vmatpush.bf16.msra.mxu0 %v174
  %1214 = vmatmul.bf16.gmra.mxu0 %v1172
  %v1215 = vpop.f32.mrf.mxu0
  %v1216 = vadd.f32 %v1178, %v1215
  %v1217 = vpop.f32.mrf.mxu0
  %1218 = vdwg.mxu0
  %1219 = vmatpush.bf16.msra.mxu0 %v203
  %1220 = vmatpush.bf16.msra.mxu0 %v199
  %1221 = vmatpush.bf16.msra.mxu0 %v195
  %1222 = vmatpush.bf16.msra.mxu0 %v191
  %1223 = vmatpush.bf16.msra.mxu0 %v187
  %1224 = vmatpush.bf16.msra.mxu0 %v183
  %1225 = vmatpush.bf16.msra.mxu0 %v179
  %1226 = vmatpush.bf16.msra.mxu0 %v175
  %1227 = vmatmul.bf16.gmra.mxu0 %v1172
  %v1228 = vpop.f32.mrf.mxu0
  %v1229 = vadd.f32 %v1179, %v1228
  %v1230 = vpop.f32.mrf.mxu0
  %1231 = vdwg.mxu0
  %v1232 = vxor.u32 %v1190, 2147483648
  %v1233 = vmul.f32 %v1232, 1.442695
  %v1234 = vpow.pop %v1233
  %v1235 = vadd.f32 %v1234, 1.0
  %v1236 = vrcp.pop %v1235
  %v1237 = vmul.f32 %v1235, %v1236
  %v1238 = vsub.f32 1.0, %v1237
  %v1239 = vmul.f32 %v1236, %v1238
  %v1240 = vadd.f32 %v1236, %v1239
  %vm1241 = vweird.f32 %v1235
  %vm1242 = vweird.f32 %v1236
  %vm1243 = vmor %vm1241, %vm1242
  %v1244 = vsel %vm1243, %v1236, %v1240
  %v1245 = vand.u32 2147483647, %v1235
  %vm1246 = vcmp.eq.f32.partialorder %v1245, 8.507059e+37
  %v1247 = vand.u32 %v1235, 2147483648
  %v1248 = vor.u32 1.1754944e-38, %v1247
  %v1249 = vsel %vm1246, %v1248, %v1244
  %v1250 = vmul.f32 1.0, %v1249
  %v1251 = vxor.u32 %v1203, 2147483648
  %v1252 = vmul.f32 %v1251, 1.442695
  %v1253 = vpow.pop %v1252
  %v1254 = vadd.f32 %v1253, 1.0
  %v1255 = vrcp.pop %v1254
  %v1256 = vmul.f32 %v1254, %v1255
  %v1257 = vsub.f32 1.0, %v1256
  %v1258 = vmul.f32 %v1255, %v1257
  %v1259 = vadd.f32 %v1255, %v1258
  %vm1260 = vweird.f32 %v1254
  %vm1261 = vweird.f32 %v1255
  %vm1262 = vmor %vm1260, %vm1261
  %v1263 = vsel %vm1262, %v1255, %v1259
  %v1264 = vand.u32 2147483647, %v1254
  %vm1265 = vcmp.eq.f32.partialorder %v1264, 8.507059e+37
  %v1266 = vand.u32 %v1254, 2147483648
  %v1267 = vor.u32 1.1754944e-38, %v1266
  %v1268 = vsel %vm1265, %v1267, %v1263
  %v1269 = vmul.f32 1.0, %v1268
  %v1270 = vtanh.pop %v1216
  %v1271 = vxor.u32 %v1229, 2147483648
  %v1272 = vmul.f32 %v1271, 1.442695
  %v1273 = vpow.pop %v1272
  %v1274 = vadd.f32 %v1273, 1.0
  %v1275 = vrcp.pop %v1274
  %v1276 = vmul.f32 %v1274, %v1275
  %v1277 = vsub.f32 1.0, %v1276
  %v1278 = vmul.f32 %v1275, %v1277
  %v1279 = vadd.f32 %v1275, %v1278
  %vm1280 = vweird.f32 %v1274
  %vm1281 = vweird.f32 %v1275
  %vm1282 = vmor %vm1280, %vm1281
  %v1283 = vsel %vm1282, %v1275, %v1279
  %v1284 = vand.u32 2147483647, %v1274
  %vm1285 = vcmp.eq.f32.partialorder %v1284, 8.507059e+37
  %v1286 = vand.u32 %v1274, 2147483648
  %v1287 = vor.u32 1.1754944e-38, %v1286
  %v1288 = vsel %vm1285, %v1287, %v1283
  %v1289 = vmul.f32 1.0, %v1288
  %v1290 = vmul.f32 %v1269, %v1171
  %v1291 = vmul.f32 %v1250, %v1270
  %v1292 = vadd.f32 %v1290, %v1291
  %v1293 = vtanh.pop %v1292
  %v1294 = vmul.f32 %v1289, %v1293
  %v1295 = vpack.c.bf16 %v1294, %v1294
  %s1296 = scalar_lea.vmem %s4, 28
  %1297 = vst [vmem:[%s1296] sm:$0xf] %v1295
  %1298 = vst [vmem:[#allocation2] sm:$0xff] %v1294
  %1299 = vst [vmem:[#allocation2 + $0x8] sm:$0xff] %v1292
  // Predicated region
  $region22: #{_lambda_.1} parent=0 // pred_check
    %p1300 = pneg %p19
  $region23: #{_lambda_.1} parent=0 // pred_check_branch
    %1302 = sbr.rel (%p1300) target = $region25
  $region24: #{_lambda_.1} parent=0 // pred_region
    %v1303 = vld [vmem:[#allocation2] sm:$0xff]
    %v1304 = vld [vmem:[#allocation2 + $0x8] sm:$0xff]
    %1305 = vst [vmem:[%s5] sm:$0xff] %v1303
    %1306 = vst [vmem:[%s5 + $0x8] sm:$0xff] %v1304
  $region25: #{_lambda_.1} parent=0 // pred_fallthru
    _
  // Predicated region
  $region26: #{_lambda_.1} parent=0 // pred_check
    _
  $region27: #{_lambda_.1} parent=0 // pred_check_branch
    %1308 = sbr.rel (0) target = $region29
  $region28: #{_lambda_.1} parent=0 // pred_region
    _
  $region29: #{_lambda_.1} parent=0 // pred_fallthru
    _
  // Predicated region
  $region30: #{_lambda_.1} parent=0 // pred_check
    _
  $region31: #{_lambda_.1} parent=0 // pred_check_branch
    %1310 = sbr.rel (0) target = $region33
  $region32: #{_lambda_.1} parent=0 // pred_region
    _
  $region33: #{_lambda_.1} parent=0 // pred_fallthru
    _
  // Predicated region
  $region34: #{_lambda_.1} parent=0 // pred_check
    _
  $region35: #{_lambda_.1} parent=0 // pred_check_branch
    %1312 = sbr.rel (0) target = $region37
  $region36: #{_lambda_.1} parent=0 // pred_region
    _
  $region37: #{_lambda_.1} parent=0 // pred_fallthru
    _
  // Predicated region
  $region38: #{_lambda_.1} parent=0 // pred_check
    _
  $region39: #{_lambda_.1} parent=0 // pred_check_branch
    %1314 = sbr.rel (0) target = $region41
  $region40: #{_lambda_.1} parent=0 // pred_region
    _
  $region41: #{_lambda_.1} parent=0 // pred_fallthru
    _

</llo_original>
